<compile_context>
chip_gen: v5e
topology: v5e:2x2
jax: 0.10.0
libtpu: 0.0.40
codegen_flags: <defaults>
</compile_context>

<pallas_src>
import numpy as np
import jax
import jax.numpy as jnp
from jax.experimental import pallas as pl
from jax.experimental.pallas import tpu as pltpu

# ------------------------- model hyperparameters (small) -------------------------
INPUT_SIZE = 32
HIDDEN_SIZE = 16
NUM_LAYERS = 2
NUM_DIRS = 2          # bidirectional
BATCH = 2
SEQ = 8


# ------------------------------- Pallas kernel -----------------------------------
def _encoder_kernel(x2_ref, win0_ref, whh0_ref, b0_ref,
                    win1_ref, whh1_ref, b1_ref,
                    out_ref, hn_ref, cn_ref, mid_ref):
    """Whole 2-layer bidirectional LSTM in one kernel invocation.

    Packed gate layout (8H columns): [i_f,i_b, f_f,f_b, g_f,g_b, o_f,o_b];
    packed hidden/cell layout (2H columns): [fwd | bwd].

    x2_ref  : (T*B, 2D)   row block t = [x(t) | x(T-1-t)]
    win*_ref: (2*Din, 8H) block-diagonal packed W_ih^T (fwd rows | bwd rows)
    whh*_ref: (2H, 8H)    block-diagonal packed W_hh^T
    b*_ref  : (1, 8H)     packed b_ih + b_hh
    out_ref : (T*B, 2H)   last-layer outputs, columns [fwd | bwd]
    hn_ref  : (4, B, H)   final hidden  [l0 fwd, l0 bwd, l1 fwd, l1 bwd]
    cn_ref  : (4, B, H)   final cell
    mid_ref : (T*B, 4H)   VMEM scratch; row block s = [mid(s) | mid(T-1-s)]
                          where mid(s) = [h0_f(s) | h0_b(s)]
    """
    B = hn_ref.shape[1]
    H = hn_ref.shape[2]
    TB = out_ref.shape[0]
    T = TB // B
    H2 = 2 * H

    def lstm_steps(gx, whh, store_fn):
        """Run T combined fwd+bwd steps; gx is (T*B, 8H) pre-projected gates."""
        hcat = jnp.zeros((B, H2), jnp.float32)
        ccat = jnp.zeros((B, H2), jnp.float32)
        for t in range(T):                       # static unroll, static slices
            r0 = t * B
            gates = gx[r0:r0 + B, :] + jnp.dot(
                hcat, whh, preferred_element_type=jnp.float32)
            i = jax.nn.sigmoid(gates[:, 0 * H2:1 * H2])
            f = jax.nn.sigmoid(gates[:, 1 * H2:2 * H2])
            g = jnp.tanh(gates[:, 2 * H2:3 * H2])
            o = jax.nn.sigmoid(gates[:, 3 * H2:4 * H2])
            ccat = f * ccat + i * g
            hcat = o * jnp.tanh(ccat)
            store_fn(t, hcat)
        return hcat, ccat

    # ------------------------------- layer 0 -------------------------------------
    # Whole-sequence input projection: one lane-dense (…,128) MXU matmul.
    gx0 = jnp.dot(x2_ref[...], win0_ref[...],
                  preferred_element_type=jnp.float32) + b0_ref[...]

    def store_mid(t, hcat):
        rf0 = t * B                   # fwd hidden belongs to time t
        rb0 = (T - 1 - t) * B         # bwd hidden belongs to time T-1-t
        hf = hcat[:, 0:H]
        hb = hcat[:, H:H2]
        mid_ref[rf0:rf0 + B, 0 * H:1 * H] = hf     # mid(t)       fwd half
        mid_ref[rb0:rb0 + B, 1 * H:2 * H] = hb     # mid(T-1-t)   bwd half
        mid_ref[rb0:rb0 + B, 2 * H:3 * H] = hf     # mirrored copy for the bwd
        mid_ref[rf0:rf0 + B, 3 * H:4 * H] = hb     #   stream of layer 1
    hcat0, ccat0 = lstm_steps(gx0, whh0_ref[...], store_mid)

    hn_ref[0] = hcat0[:, 0:H]
    hn_ref[1] = hcat0[:, H:H2]
    cn_ref[0] = ccat0[:, 0:H]
    cn_ref[1] = ccat0[:, H:H2]

    # TODO(synk): nn.LSTM applies dropout(p=0.1) to this layer's output only in
    # training mode; eval/inference semantics are implemented here.

    # ------------------------------- layer 1 -------------------------------------
    gx1 = jnp.dot(mid_ref[...], win1_ref[...],
                  preferred_element_type=jnp.float32) + b1_ref[...]

    def store_out(t, hcat):
        rf0 = t * B
        rb0 = (T - 1 - t) * B
        out_ref[rf0:rf0 + B, 0:H] = hcat[:, 0:H]
        out_ref[rb0:rb0 + B, H:H2] = hcat[:, H:H2]
    hcat1, ccat1 = lstm_steps(gx1, whh1_ref[...], store_out)

    hn_ref[2] = hcat1[:, 0:H]
    hn_ref[3] = hcat1[:, H:H2]
    cn_ref[2] = ccat1[:, 0:H]
    cn_ref[3] = ccat1[:, H:H2]


# ------------------------------ weight packing ------------------------------------
def _pack_layer(layer_params, hidden_size):
    """Pack one layer's per-direction PyTorch weights into the kernel layout.

    Gate column blocks: col(g, d) = (2*g + d)*H : (2*g + d + 1)*H
      (g in {i, f, g, o} PyTorch order, d in {fwd, bwd}).
    Input rows: [0:Din] feed the fwd gates, [Din:2Din] feed the bwd gates.
    Hidden rows: [0:H] = fwd h, [H:2H] = bwd h (block-diagonal).
    """
    H = hidden_size
    din = layer_params[0]["w_ih"].shape[1]
    w_in = jnp.zeros((2 * din, 8 * H), jnp.float32)
    w_hh = jnp.zeros((2 * H, 8 * H), jnp.float32)
    bias = jnp.zeros((1, 8 * H), jnp.float32)
    for d, p in enumerate(layer_params):
        wih_t = jnp.transpose(p["w_ih"])          # (Din, 4H)
        whh_t = jnp.transpose(p["w_hh"])          # (H,   4H)
        b_sum = p["b_ih"] + p["b_hh"]             # (4H,)
        for g in range(4):
            c0 = (2 * g + d) * H
            w_in = w_in.at[d * din:(d + 1) * din, c0:c0 + H].set(
                wih_t[:, g * H:(g + 1) * H])
            w_hh = w_hh.at[d * H:(d + 1) * H, c0:c0 + H].set(
                whh_t[:, g * H:(g + 1) * H])
            bias = bias.at[0, c0:c0 + H].set(b_sum[g * H:(g + 1) * H])
    return w_in, w_hh, bias


# -------------------------------- encoder forward --------------------------------
@jax.jit
def encoder_forward(params, x_btd):
    """Mirrors: output, (h_n, c_n) = nn.LSTM(..., batch_first=True,
    bidirectional=True, num_layers=2)(x).   x_btd: (B, T, input_size)."""
    B, T, D = x_btd.shape
    H = HIDDEN_SIZE

    # Time-major rows with the time-reversed copy alongside: [x(t) | x(T-1-t)].
    x_tbd = jnp.transpose(x_btd, (1, 0, 2))                       # (T, B, D)
    x2 = jnp.concatenate([x_tbd, x_tbd[::-1]], axis=-1)           # (T, B, 2D)
    x2 = x2.reshape(T * B, 2 * D)

    win0, whh0, b0 = _pack_layer(params[0], H)
    win1, whh1, b1 = _pack_layer(params[1], H)

    vmem = pl.BlockSpec(memory_space=pltpu.MemorySpace.VMEM)
    out2d, h_n, c_n = pl.pallas_call(
        _encoder_kernel,
        out_shape=(
            jax.ShapeDtypeStruct((T * B, NUM_DIRS * H), jnp.float32),
            jax.ShapeDtypeStruct((NUM_LAYERS * NUM_DIRS, B, H), jnp.float32),
            jax.ShapeDtypeStruct((NUM_LAYERS * NUM_DIRS, B, H), jnp.float32),
        ),
        in_specs=[vmem] * 7,
        out_specs=(vmem, vmem, vmem),
        scratch_shapes=[pltpu.VMEM((T * B, 2 * NUM_DIRS * H), jnp.float32)],
    )(x2, win0, whh0, b0, win1, whh1, b1)

    output = jnp.transpose(out2d.reshape(T, B, NUM_DIRS * H), (1, 0, 2))  # (B,T,2H)
    return output, (h_n, c_n)


# ------------------------------ pure-JAX reference --------------------------------
def _ref_layer_dir(x_tbd, w_ih, w_hh, b_ih, b_hh):
    H = w_hh.shape[1]
    B = x_tbd.shape[1]

    def step(carry, x_t):
        h, c = carry
        gates = (jnp.dot(x_t, w_ih.T, preferred_element_type=jnp.float32)
                 + jnp.dot(h, w_hh.T, preferred_element_type=jnp.float32)
                 + b_ih + b_hh)
        i = jax.nn.sigmoid(gates[:, :H])
        f = jax.nn.sigmoid(gates[:, H:2 * H])
        g = jnp.tanh(gates[:, 2 * H:3 * H])
        o = jax.nn.sigmoid(gates[:, 3 * H:])
        c = f * c + i * g
        h = o * jnp.tanh(c)
        return (h, c), h

    init = (jnp.zeros((B, H), jnp.float32), jnp.zeros((B, H), jnp.float32))
    (h, c), ys = jax.lax.scan(step, init, x_tbd)
    return ys, h, c


def encoder_forward_ref(params, x_btd):
    x_tbd = jnp.transpose(x_btd, (1, 0, 2))
    layer_in = x_tbd
    h_list, c_list = [], []
    for layer in range(NUM_LAYERS):
        dir_outs = []
        for d in range(NUM_DIRS):
            p = params[layer][d]
            xin = layer_in if d == 0 else layer_in[::-1]
            out, h_n, c_n = _ref_layer_dir(xin, p["w_ih"], p["w_hh"],
                                           p["b_ih"], p["b_hh"])
            if d == 1:
                out = out[::-1]
            dir_outs.append(out)
            h_list.append(h_n)
            c_list.append(c_n)
        layer_in = jnp.concatenate(dir_outs, axis=-1)
    output = jnp.transpose(layer_in, (1, 0, 2))
    return output, (jnp.stack(h_list, 0), jnp.stack(c_list, 0))


# --------------------------------- parameters -------------------------------------
def init_params(key, input_size, hidden_size, num_layers):
    """Deterministic PyTorch-style init: U(-1/sqrt(H), 1/sqrt(H))."""
    params = []
    bound = 1.0 / np.sqrt(hidden_size)
    for layer in range(num_layers):
        in_sz = input_size if layer == 0 else NUM_DIRS * hidden_size
        layer_p = []
        for _ in range(NUM_DIRS):
            key, k1, k2, k3, k4 = jax.random.split(key, 5)
            layer_p.append(dict(
                w_ih=jax.random.uniform(k1, (4 * hidden_size, in_sz),
                                        jnp.float32, -bound, bound),
                w_hh=jax.random.uniform(k2, (4 * hidden_size, hidden_size),
                                        jnp.float32, -bound, bound),
                b_ih=jax.random.uniform(k3, (4 * hidden_size,),
                                        jnp.float32, -bound, bound),
                b_hh=jax.random.uniform(k4, (4 * hidden_size,),
                                        jnp.float32, -bound, bound),
            ))
        params.append(layer_p)
    return params


# ------------------------------------ main -----------------------------------------
if __name__ == "__main__":
    root = jax.random.PRNGKey(0)
    k_param, k_x = jax.random.split(root)
    params = init_params(k_param, INPUT_SIZE, HIDDEN_SIZE, NUM_LAYERS)
    x = jax.random.normal(k_x, (BATCH, SEQ, INPUT_SIZE), jnp.float32)

    output, (h_n, c_n) = encoder_forward(params, x)
    jax.block_until_ready((output, h_n, c_n))

    # sanity: shapes match PyTorch LSTM(batch_first=True, bidirectional=True)
    assert output.shape == (BATCH, SEQ, NUM_DIRS * HIDDEN_SIZE)
    assert h_n.shape == (NUM_LAYERS * NUM_DIRS, BATCH, HIDDEN_SIZE)
    assert c_n.shape == (NUM_LAYERS * NUM_DIRS, BATCH, HIDDEN_SIZE)

    # numeric check against pure-JAX reference
    ref_out, (ref_h, ref_c) = encoder_forward_ref(params, x)
    np.testing.assert_allclose(np.asarray(output), np.asarray(ref_out),
                               rtol=5e-3, atol=5e-3)
    np.testing.assert_allclose(np.asarray(h_n), np.asarray(ref_h),
                               rtol=5e-3, atol=5e-3)
    np.testing.assert_allclose(np.asarray(c_n), np.asarray(ref_c),
                               rtol=5e-3, atol=5e-3)

    print("KERNEL_OK")
</pallas_src>

<mosaic_0001>
module attributes {stable_mosaic.version = 11 : i64} {
  func.func @_encoder_kernel(%arg0: memref<16x64xf32, #tpu.memory_space<vmem>>, %arg1: memref<64x128xf32, #tpu.memory_space<vmem>>, %arg2: memref<32x128xf32, #tpu.memory_space<vmem>>, %arg3: memref<1x128xf32, #tpu.memory_space<vmem>>, %arg4: memref<64x128xf32, #tpu.memory_space<vmem>>, %arg5: memref<32x128xf32, #tpu.memory_space<vmem>>, %arg6: memref<1x128xf32, #tpu.memory_space<vmem>>, %arg7: memref<16x32xf32, #tpu.memory_space<vmem>>, %arg8: memref<4x2x16xf32, #tpu.memory_space<vmem>>, %arg9: memref<4x2x16xf32, #tpu.memory_space<vmem>>, %arg10: memref<16x64xf32, #tpu.memory_space<vmem>>) attributes {dimension_semantics = [], scalar_prefetch = 0 : i64, scratch_operands = 1 : i64, tpu.core_type = #tpu.core_type<tc>} {
    %c0 = arith.constant 0 : index
    %c0_0 = arith.constant 0 : index
    %0 = vector.load %arg0[%c0, %c0_0] : memref<16x64xf32, #tpu.memory_space<vmem>>, vector<16x64xf32>
    %c0_1 = arith.constant 0 : index
    %c0_2 = arith.constant 0 : index
    %1 = vector.load %arg1[%c0_1, %c0_2] : memref<64x128xf32, #tpu.memory_space<vmem>>, vector<64x128xf32>
    %cst = arith.constant dense<0.000000e+00> : vector<16x128xf32>
    %2 = tpu.matmul %0, %1, %cst {dimension_numbers = #tpu.dot_dimension_numbers<[1], [0], [0], [1], [0, 0, 1, 1], [], []>} : vector<16x64xf32>, vector<64x128xf32>, vector<16x128xf32> -> vector<16x128xf32>
    %c0_3 = arith.constant 0 : index
    %c0_4 = arith.constant 0 : index
    %3 = vector.load %arg3[%c0_3, %c0_4] : memref<1x128xf32, #tpu.memory_space<vmem>>, vector<1x128xf32>
    %4 = vector.broadcast %3 : vector<1x128xf32> to vector<16x128xf32>
    %5 = arith.addf %2, %4 : vector<16x128xf32>
    %c0_5 = arith.constant 0 : index
    %c0_6 = arith.constant 0 : index
    %6 = vector.load %arg2[%c0_5, %c0_6] : memref<32x128xf32, #tpu.memory_space<vmem>>, vector<32x128xf32>
    %cst_7 = arith.constant 0.000000e+00 : f32
    %7 = vector.broadcast %cst_7 : f32 to vector<2x32xf32>
    %cst_8 = arith.constant 0.000000e+00 : f32
    %8 = vector.broadcast %cst_8 : f32 to vector<2x32xf32>
    %9 = vector.extract_strided_slice %5 {offsets = [0, 0], sizes = [2, 128], strides = [1, 1]} : vector<16x128xf32> to vector<2x128xf32>
    %cst_9 = arith.constant dense<0.000000e+00> : vector<2x128xf32>
    %10 = tpu.matmul %7, %6, %cst_9 {dimension_numbers = #tpu.dot_dimension_numbers<[1], [0], [0], [1], [0, 0, 1, 1], [], []>} : vector<2x32xf32>, vector<32x128xf32>, vector<2x128xf32> -> vector<2x128xf32>
    %11 = arith.addf %9, %10 : vector<2x128xf32>
    %12 = vector.extract_strided_slice %11 {offsets = [0, 0], sizes = [2, 32], strides = [1, 1]} : vector<2x128xf32> to vector<2x32xf32>
    %13 = arith.negf %12 : vector<2x32xf32>
    %14 = math.exp %13 : vector<2x32xf32>
    %cst_10 = arith.constant 1.000000e+00 : f32
    %15 = vector.broadcast %cst_10 : f32 to vector<2x32xf32>
    %16 = arith.addf %15, %14 : vector<2x32xf32>
    %17 = arith.divf %15, %16 : vector<2x32xf32>
    %18 = vector.extract_strided_slice %11 {offsets = [0, 32], sizes = [2, 32], strides = [1, 1]} : vector<2x128xf32> to vector<2x32xf32>
    %19 = arith.negf %18 : vector<2x32xf32>
    %20 = math.exp %19 : vector<2x32xf32>
    %cst_11 = arith.constant 1.000000e+00 : f32
    %21 = vector.broadcast %cst_11 : f32 to vector<2x32xf32>
    %22 = arith.addf %21, %20 : vector<2x32xf32>
    %23 = arith.divf %21, %22 : vector<2x32xf32>
    %24 = vector.extract_strided_slice %11 {offsets = [0, 64], sizes = [2, 32], strides = [1, 1]} : vector<2x128xf32> to vector<2x32xf32>
    %25 = math.tanh %24 : vector<2x32xf32>
    %26 = vector.extract_strided_slice %11 {offsets = [0, 96], sizes = [2, 32], strides = [1, 1]} : vector<2x128xf32> to vector<2x32xf32>
    %27 = arith.negf %26 : vector<2x32xf32>
    %28 = math.exp %27 : vector<2x32xf32>
    %cst_12 = arith.constant 1.000000e+00 : f32
    %29 = vector.broadcast %cst_12 : f32 to vector<2x32xf32>
    %30 = arith.addf %29, %28 : vector<2x32xf32>
    %31 = arith.divf %29, %30 : vector<2x32xf32>
    %32 = arith.mulf %23, %8 : vector<2x32xf32>
    %33 = arith.mulf %17, %25 : vector<2x32xf32>
    %34 = arith.addf %32, %33 : vector<2x32xf32>
    %35 = math.tanh %34 : vector<2x32xf32>
    %36 = arith.mulf %31, %35 : vector<2x32xf32>
    %37 = vector.extract_strided_slice %36 {offsets = [0, 0], sizes = [2, 16], strides = [1, 1]} : vector<2x32xf32> to vector<2x16xf32>
    %38 = vector.extract_strided_slice %36 {offsets = [0, 16], sizes = [2, 16], strides = [1, 1]} : vector<2x32xf32> to vector<2x16xf32>
    %c0_13 = arith.constant 0 : index
    %c0_14 = arith.constant 0 : index
    %39 = vector.load %arg10[%c0_13, %c0_14] : memref<16x64xf32, #tpu.memory_space<vmem>>, vector<2x16xf32>
    tpu.vector_store %arg10[%c0_13, %c0_14], %37 {strides = array<i32>} : memref<16x64xf32, #tpu.memory_space<vmem>>, vector<2x16xf32>,
    %c14 = arith.constant 14 : index
    %c16 = arith.constant 16 : index
    %40 = vector.load %arg10[%c14, %c16] : memref<16x64xf32, #tpu.memory_space<vmem>>, vector<2x16xf32>
    tpu.vector_store %arg10[%c14, %c16], %38 {strides = array<i32>} : memref<16x64xf32, #tpu.memory_space<vmem>>, vector<2x16xf32>,
    %c14_15 = arith.constant 14 : index
    %c32 = arith.constant 32 : index
    %41 = vector.load %arg10[%c14_15, %c32] : memref<16x64xf32, #tpu.memory_space<vmem>>, vector<2x16xf32>
    tpu.vector_store %arg10[%c14_15, %c32], %37 {strides = array<i32>} : memref<16x64xf32, #tpu.memory_space<vmem>>, vector<2x16xf32>,
    %c0_16 = arith.constant 0 : index
    %c48 = arith.constant 48 : index
    %42 = vector.load %arg10[%c0_16, %c48] : memref<16x64xf32, #tpu.memory_space<vmem>>, vector<2x16xf32>
    tpu.vector_store %arg10[%c0_16, %c48], %38 {strides = array<i32>} : memref<16x64xf32, #tpu.memory_space<vmem>>, vector<2x16xf32>,
    %43 = vector.extract_strided_slice %5 {offsets = [2, 0], sizes = [2, 128], strides = [1, 1]} : vector<16x128xf32> to vector<2x128xf32>
    %cst_17 = arith.constant dense<0.000000e+00> : vector<2x128xf32>
    %44 = tpu.matmul %36, %6, %cst_17 {dimension_numbers = #tpu.dot_dimension_numbers<[1], [0], [0], [1], [0, 0, 1, 1], [], []>} : vector<2x32xf32>, vector<32x128xf32>, vector<2x128xf32> -> vector<2x128xf32>
    %45 = arith.addf %43, %44 : vector<2x128xf32>
    %46 = vector.extract_strided_slice %45 {offsets = [0, 0], sizes = [2, 32], strides = [1, 1]} : vector<2x128xf32> to vector<2x32xf32>
    %47 = arith.negf %46 : vector<2x32xf32>
    %48 = math.exp %47 : vector<2x32xf32>
    %cst_18 = arith.constant 1.000000e+00 : f32
    %49 = vector.broadcast %cst_18 : f32 to vector<2x32xf32>
    %50 = arith.addf %49, %48 : vector<2x32xf32>
    %51 = arith.divf %49, %50 : vector<2x32xf32>
    %52 = vector.extract_strided_slice %45 {offsets = [0, 32], sizes = [2, 32], strides = [1, 1]} : vector<2x128xf32> to vector<2x32xf32>
    %53 = arith.negf %52 : vector<2x32xf32>
    %54 = math.exp %53 : vector<2x32xf32>
    %cst_19 = arith.constant 1.000000e+00 : f32
    %55 = vector.broadcast %cst_19 : f32 to vector<2x32xf32>
    %56 = arith.addf %55, %54 : vector<2x32xf32>
    %57 = arith.divf %55, %56 : vector<2x32xf32>
    %58 = vector.extract_strided_slice %45 {offsets = [0, 64], sizes = [2, 32], strides = [1, 1]} : vector<2x128xf32> to vector<2x32xf32>
    %59 = math.tanh %58 : vector<2x32xf32>
    %60 = vector.extract_strided_slice %45 {offsets = [0, 96], sizes = [2, 32], strides = [1, 1]} : vector<2x128xf32> to vector<2x32xf32>
    %61 = arith.negf %60 : vector<2x32xf32>
    %62 = math.exp %61 : vector<2x32xf32>
    %cst_20 = arith.constant 1.000000e+00 : f32
    %63 = vector.broadcast %cst_20 : f32 to vector<2x32xf32>
    %64 = arith.addf %63, %62 : vector<2x32xf32>
    %65 = arith.divf %63, %64 : vector<2x32xf32>
    %66 = arith.mulf %57, %34 : vector<2x32xf32>
    %67 = arith.mulf %51, %59 : vector<2x32xf32>
    %68 = arith.addf %66, %67 : vector<2x32xf32>
    %69 = math.tanh %68 : vector<2x32xf32>
    %70 = arith.mulf %65, %69 : vector<2x32xf32>
    %71 = vector.extract_strided_slice %70 {offsets = [0, 0], sizes = [2, 16], strides = [1, 1]} : vector<2x32xf32> to vector<2x16xf32>
    %72 = vector.extract_strided_slice %70 {offsets = [0, 16], sizes = [2, 16], strides = [1, 1]} : vector<2x32xf32> to vector<2x16xf32>
    %c2 = arith.constant 2 : index
    %c0_21 = arith.constant 0 : index
    %73 = vector.load %arg10[%c2, %c0_21] : memref<16x64xf32, #tpu.memory_space<vmem>>, vector<2x16xf32>
    tpu.vector_store %arg10[%c2, %c0_21], %71 {strides = array<i32>} : memref<16x64xf32, #tpu.memory_space<vmem>>, vector<2x16xf32>,
    %c12 = arith.constant 12 : index
    %c16_22 = arith.constant 16 : index
    %74 = vector.load %arg10[%c12, %c16_22] : memref<16x64xf32, #tpu.memory_space<vmem>>, vector<2x16xf32>
    tpu.vector_store %arg10[%c12, %c16_22], %72 {strides = array<i32>} : memref<16x64xf32, #tpu.memory_space<vmem>>, vector<2x16xf32>,
    %c12_23 = arith.constant 12 : index
    %c32_24 = arith.constant 32 : index
    %75 = vector.load %arg10[%c12_23, %c32_24] : memref<16x64xf32, #tpu.memory_space<vmem>>, vector<2x16xf32>
    tpu.vector_store %arg10[%c12_23, %c32_24], %71 {strides = array<i32>} : memref<16x64xf32, #tpu.memory_space<vmem>>, vector<2x16xf32>,
    %c2_25 = arith.constant 2 : index
    %c48_26 = arith.constant 48 : index
    %76 = vector.load %arg10[%c2_25, %c48_26] : memref<16x64xf32, #tpu.memory_space<vmem>>, vector<2x16xf32>
    tpu.vector_store %arg10[%c2_25, %c48_26], %72 {strides = array<i32>} : memref<16x64xf32, #tpu.memory_space<vmem>>, vector<2x16xf32>,
    %77 = vector.extract_strided_slice %5 {offsets = [4, 0], sizes = [2, 128], strides = [1, 1]} : vector<16x128xf32> to vector<2x128xf32>
    %cst_27 = arith.constant dense<0.000000e+00> : vector<2x128xf32>
    %78 = tpu.matmul %70, %6, %cst_27 {dimension_numbers = #tpu.dot_dimension_numbers<[1], [0], [0], [1], [0, 0, 1, 1], [], []>} : vector<2x32xf32>, vector<32x128xf32>, vector<2x128xf32> -> vector<2x128xf32>
    %79 = arith.addf %77, %78 : vector<2x128xf32>
    %80 = vector.extract_strided_slice %79 {offsets = [0, 0], sizes = [2, 32], strides = [1, 1]} : vector<2x128xf32> to vector<2x32xf32>
    %81 = arith.negf %80 : vector<2x32xf32>
    %82 = math.exp %81 : vector<2x32xf32>
    %cst_28 = arith.constant 1.000000e+00 : f32
    %83 = vector.broadcast %cst_28 : f32 to vector<2x32xf32>
    %84 = arith.addf %83, %82 : vector<2x32xf32>
    %85 = arith.divf %83, %84 : vector<2x32xf32>
    %86 = vector.extract_strided_slice %79 {offsets = [0, 32], sizes = [2, 32], strides = [1, 1]} : vector<2x128xf32> to vector<2x32xf32>
    %87 = arith.negf %86 : vector<2x32xf32>
    %88 = math.exp %87 : vector<2x32xf32>
    %cst_29 = arith.constant 1.000000e+00 : f32
    %89 = vector.broadcast %cst_29 : f32 to vector<2x32xf32>
    %90 = arith.addf %89, %88 : vector<2x32xf32>
    %91 = arith.divf %89, %90 : vector<2x32xf32>
    %92 = vector.extract_strided_slice %79 {offsets = [0, 64], sizes = [2, 32], strides = [1, 1]} : vector<2x128xf32> to vector<2x32xf32>
    %93 = math.tanh %92 : vector<2x32xf32>
    %94 = vector.extract_strided_slice %79 {offsets = [0, 96], sizes = [2, 32], strides = [1, 1]} : vector<2x128xf32> to vector<2x32xf32>
    %95 = arith.negf %94 : vector<2x32xf32>
    %96 = math.exp %95 : vector<2x32xf32>
    %cst_30 = arith.constant 1.000000e+00 : f32
    %97 = vector.broadcast %cst_30 : f32 to vector<2x32xf32>
    %98 = arith.addf %97, %96 : vector<2x32xf32>
    %99 = arith.divf %97, %98 : vector<2x32xf32>
    %100 = arith.mulf %91, %68 : vector<2x32xf32>
    %101 = arith.mulf %85, %93 : vector<2x32xf32>
    %102 = arith.addf %100, %101 : vector<2x32xf32>
    %103 = math.tanh %102 : vector<2x32xf32>
    %104 = arith.mulf %99, %103 : vector<2x32xf32>
    %105 = vector.extract_strided_slice %104 {offsets = [0, 0], sizes = [2, 16], strides = [1, 1]} : vector<2x32xf32> to vector<2x16xf32>
    %106 = vector.extract_strided_slice %104 {offsets = [0, 16], sizes = [2, 16], strides = [1, 1]} : vector<2x32xf32> to vector<2x16xf32>
    %c4 = arith.constant 4 : index
    %c0_31 = arith.constant 0 : index
    %107 = vector.load %arg10[%c4, %c0_31] : memref<16x64xf32, #tpu.memory_space<vmem>>, vector<2x16xf32>
    tpu.vector_store %arg10[%c4, %c0_31], %105 {strides = array<i32>} : memref<16x64xf32, #tpu.memory_space<vmem>>, vector<2x16xf32>,
    %c10 = arith.constant 10 : index
    %c16_32 = arith.constant 16 : index
    %108 = vector.load %arg10[%c10, %c16_32] : memref<16x64xf32, #tpu.memory_space<vmem>>, vector<2x16xf32>
    tpu.vector_store %arg10[%c10, %c16_32], %106 {strides = array<i32>} : memref<16x64xf32, #tpu.memory_space<vmem>>, vector<2x16xf32>,
    %c10_33 = arith.constant 10 : index
    %c32_34 = arith.constant 32 : index
    %109 = vector.load %arg10[%c10_33, %c32_34] : memref<16x64xf32, #tpu.memory_space<vmem>>, vector<2x16xf32>
    tpu.vector_store %arg10[%c10_33, %c32_34], %105 {strides = array<i32>} : memref<16x64xf32, #tpu.memory_space<vmem>>, vector<2x16xf32>,
    %c4_35 = arith.constant 4 : index
    %c48_36 = arith.constant 48 : index
    %110 = vector.load %arg10[%c4_35, %c48_36] : memref<16x64xf32, #tpu.memory_space<vmem>>, vector<2x16xf32>
    tpu.vector_store %arg10[%c4_35, %c48_36], %106 {strides = array<i32>} : memref<16x64xf32, #tpu.memory_space<vmem>>, vector<2x16xf32>,
    %111 = vector.extract_strided_slice %5 {offsets = [6, 0], sizes = [2, 128], strides = [1, 1]} : vector<16x128xf32> to vector<2x128xf32>
    %cst_37 = arith.constant dense<0.000000e+00> : vector<2x128xf32>
    %112 = tpu.matmul %104, %6, %cst_37 {dimension_numbers = #tpu.dot_dimension_numbers<[1], [0], [0], [1], [0, 0, 1, 1], [], []>} : vector<2x32xf32>, vector<32x128xf32>, vector<2x128xf32> -> vector<2x128xf32>
    %113 = arith.addf %111, %112 : vector<2x128xf32>
    %114 = vector.extract_strided_slice %113 {offsets = [0, 0], sizes = [2, 32], strides = [1, 1]} : vector<2x128xf32> to vector<2x32xf32>
    %115 = arith.negf %114 : vector<2x32xf32>
    %116 = math.exp %115 : vector<2x32xf32>
    %cst_38 = arith.constant 1.000000e+00 : f32
    %117 = vector.broadcast %cst_38 : f32 to vector<2x32xf32>
    %118 = arith.addf %117, %116 : vector<2x32xf32>
    %119 = arith.divf %117, %118 : vector<2x32xf32>
    %120 = vector.extract_strided_slice %113 {offsets = [0, 32], sizes = [2, 32], strides = [1, 1]} : vector<2x128xf32> to vector<2x32xf32>
    %121 = arith.negf %120 : vector<2x32xf32>
    %122 = math.exp %121 : vector<2x32xf32>
    %cst_39 = arith.constant 1.000000e+00 : f32
    %123 = vector.broadcast %cst_39 : f32 to vector<2x32xf32>
    %124 = arith.addf %123, %122 : vector<2x32xf32>
    %125 = arith.divf %123, %124 : vector<2x32xf32>
    %126 = vector.extract_strided_slice %113 {offsets = [0, 64], sizes = [2, 32], strides = [1, 1]} : vector<2x128xf32> to vector<2x32xf32>
    %127 = math.tanh %126 : vector<2x32xf32>
    %128 = vector.extract_strided_slice %113 {offsets = [0, 96], sizes = [2, 32], strides = [1, 1]} : vector<2x128xf32> to vector<2x32xf32>
    %129 = arith.negf %128 : vector<2x32xf32>
    %130 = math.exp %129 : vector<2x32xf32>
    %cst_40 = arith.constant 1.000000e+00 : f32
    %131 = vector.broadcast %cst_40 : f32 to vector<2x32xf32>
    %132 = arith.addf %131, %130 : vector<2x32xf32>
    %133 = arith.divf %131, %132 : vector<2x32xf32>
    %134 = arith.mulf %125, %102 : vector<2x32xf32>
    %135 = arith.mulf %119, %127 : vector<2x32xf32>
    %136 = arith.addf %134, %135 : vector<2x32xf32>
    %137 = math.tanh %136 : vector<2x32xf32>
    %138 = arith.mulf %133, %137 : vector<2x32xf32>
    %139 = vector.extract_strided_slice %138 {offsets = [0, 0], sizes = [2, 16], strides = [1, 1]} : vector<2x32xf32> to vector<2x16xf32>
    %140 = vector.extract_strided_slice %138 {offsets = [0, 16], sizes = [2, 16], strides = [1, 1]} : vector<2x32xf32> to vector<2x16xf32>
    %c6 = arith.constant 6 : index
    %c0_41 = arith.constant 0 : index
    %141 = vector.load %arg10[%c6, %c0_41] : memref<16x64xf32, #tpu.memory_space<vmem>>, vector<2x16xf32>
    tpu.vector_store %arg10[%c6, %c0_41], %139 {strides = array<i32>} : memref<16x64xf32, #tpu.memory_space<vmem>>, vector<2x16xf32>,
    %c8 = arith.constant 8 : index
    %c16_42 = arith.constant 16 : index
    %142 = vector.load %arg10[%c8, %c16_42] : memref<16x64xf32, #tpu.memory_space<vmem>>, vector<2x16xf32>
    tpu.vector_store %arg10[%c8, %c16_42], %140 {strides = array<i32>} : memref<16x64xf32, #tpu.memory_space<vmem>>, vector<2x16xf32>,
    %c8_43 = arith.constant 8 : index
    %c32_44 = arith.constant 32 : index
    %143 = vector.load %arg10[%c8_43, %c32_44] : memref<16x64xf32, #tpu.memory_space<vmem>>, vector<2x16xf32>
    tpu.vector_store %arg10[%c8_43, %c32_44], %139 {strides = array<i32>} : memref<16x64xf32, #tpu.memory_space<vmem>>, vector<2x16xf32>,
    %c6_45 = arith.constant 6 : index
    %c48_46 = arith.constant 48 : index
    %144 = vector.load %arg10[%c6_45, %c48_46] : memref<16x64xf32, #tpu.memory_space<vmem>>, vector<2x16xf32>
    tpu.vector_store %arg10[%c6_45, %c48_46], %140 {strides = array<i32>} : memref<16x64xf32, #tpu.memory_space<vmem>>, vector<2x16xf32>,
    %145 = vector.extract_strided_slice %5 {offsets = [8, 0], sizes = [2, 128], strides = [1, 1]} : vector<16x128xf32> to vector<2x128xf32>
    %cst_47 = arith.constant dense<0.000000e+00> : vector<2x128xf32>
    %146 = tpu.matmul %138, %6, %cst_47 {dimension_numbers = #tpu.dot_dimension_numbers<[1], [0], [0], [1], [0, 0, 1, 1], [], []>} : vector<2x32xf32>, vector<32x128xf32>, vector<2x128xf32> -> vector<2x128xf32>
    %147 = arith.addf %145, %146 : vector<2x128xf32>
    %148 = vector.extract_strided_slice %147 {offsets = [0, 0], sizes = [2, 32], strides = [1, 1]} : vector<2x128xf32> to vector<2x32xf32>
    %149 = arith.negf %148 : vector<2x32xf32>
    %150 = math.exp %149 : vector<2x32xf32>
    %cst_48 = arith.constant 1.000000e+00 : f32
    %151 = vector.broadcast %cst_48 : f32 to vector<2x32xf32>
    %152 = arith.addf %151, %150 : vector<2x32xf32>
    %153 = arith.divf %151, %152 : vector<2x32xf32>
    %154 = vector.extract_strided_slice %147 {offsets = [0, 32], sizes = [2, 32], strides = [1, 1]} : vector<2x128xf32> to vector<2x32xf32>
    %155 = arith.negf %154 : vector<2x32xf32>
    %156 = math.exp %155 : vector<2x32xf32>
    %cst_49 = arith.constant 1.000000e+00 : f32
    %157 = vector.broadcast %cst_49 : f32 to vector<2x32xf32>
    %158 = arith.addf %157, %156 : vector<2x32xf32>
    %159 = arith.divf %157, %158 : vector<2x32xf32>
    %160 = vector.extract_strided_slice %147 {offsets = [0, 64], sizes = [2, 32], strides = [1, 1]} : vector<2x128xf32> to vector<2x32xf32>
    %161 = math.tanh %160 : vector<2x32xf32>
    %162 = vector.extract_strided_slice %147 {offsets = [0, 96], sizes = [2, 32], strides = [1, 1]} : vector<2x128xf32> to vector<2x32xf32>
    %163 = arith.negf %162 : vector<2x32xf32>
    %164 = math.exp %163 : vector<2x32xf32>
    %cst_50 = arith.constant 1.000000e+00 : f32
    %165 = vector.broadcast %cst_50 : f32 to vector<2x32xf32>
    %166 = arith.addf %165, %164 : vector<2x32xf32>
    %167 = arith.divf %165, %166 : vector<2x32xf32>
    %168 = arith.mulf %159, %136 : vector<2x32xf32>
    %169 = arith.mulf %153, %161 : vector<2x32xf32>
    %170 = arith.addf %168, %169 : vector<2x32xf32>
    %171 = math.tanh %170 : vector<2x32xf32>
    %172 = arith.mulf %167, %171 : vector<2x32xf32>
    %173 = vector.extract_strided_slice %172 {offsets = [0, 0], sizes = [2, 16], strides = [1, 1]} : vector<2x32xf32> to vector<2x16xf32>
    %174 = vector.extract_strided_slice %172 {offsets = [0, 16], sizes = [2, 16], strides = [1, 1]} : vector<2x32xf32> to vector<2x16xf32>
    %c8_51 = arith.constant 8 : index
    %c0_52 = arith.constant 0 : index
    %175 = vector.load %arg10[%c8_51, %c0_52] : memref<16x64xf32, #tpu.memory_space<vmem>>, vector<2x16xf32>
    tpu.vector_store %arg10[%c8_51, %c0_52], %173 {strides = array<i32>} : memref<16x64xf32, #tpu.memory_space<vmem>>, vector<2x16xf32>,
    %c6_53 = arith.constant 6 : index
    %c16_54 = arith.constant 16 : index
    %176 = vector.load %arg10[%c6_53, %c16_54] : memref<16x64xf32, #tpu.memory_space<vmem>>, vector<2x16xf32>
    tpu.vector_store %arg10[%c6_53, %c16_54], %174 {strides = array<i32>} : memref<16x64xf32, #tpu.memory_space<vmem>>, vector<2x16xf32>,
    %c6_55 = arith.constant 6 : index
    %c32_56 = arith.constant 32 : index
    %177 = vector.load %arg10[%c6_55, %c32_56] : memref<16x64xf32, #tpu.memory_space<vmem>>, vector<2x16xf32>
    tpu.vector_store %arg10[%c6_55, %c32_56], %173 {strides = array<i32>} : memref<16x64xf32, #tpu.memory_space<vmem>>, vector<2x16xf32>,
    %c8_57 = arith.constant 8 : index
    %c48_58 = arith.constant 48 : index
    %178 = vector.load %arg10[%c8_57, %c48_58] : memref<16x64xf32, #tpu.memory_space<vmem>>, vector<2x16xf32>
    tpu.vector_store %arg10[%c8_57, %c48_58], %174 {strides = array<i32>} : memref<16x64xf32, #tpu.memory_space<vmem>>, vector<2x16xf32>,
    %179 = vector.extract_strided_slice %5 {offsets = [10, 0], sizes = [2, 128], strides = [1, 1]} : vector<16x128xf32> to vector<2x128xf32>
    %cst_59 = arith.constant dense<0.000000e+00> : vector<2x128xf32>
    %180 = tpu.matmul %172, %6, %cst_59 {dimension_numbers = #tpu.dot_dimension_numbers<[1], [0], [0], [1], [0, 0, 1, 1], [], []>} : vector<2x32xf32>, vector<32x128xf32>, vector<2x128xf32> -> vector<2x128xf32>
    %181 = arith.addf %179, %180 : vector<2x128xf32>
    %182 = vector.extract_strided_slice %181 {offsets = [0, 0], sizes = [2, 32], strides = [1, 1]} : vector<2x128xf32> to vector<2x32xf32>
    %183 = arith.negf %182 : vector<2x32xf32>
    %184 = math.exp %183 : vector<2x32xf32>
    %cst_60 = arith.constant 1.000000e+00 : f32
    %185 = vector.broadcast %cst_60 : f32 to vector<2x32xf32>
    %186 = arith.addf %185, %184 : vector<2x32xf32>
    %187 = arith.divf %185, %186 : vector<2x32xf32>
    %188 = vector.extract_strided_slice %181 {offsets = [0, 32], sizes = [2, 32], strides = [1, 1]} : vector<2x128xf32> to vector<2x32xf32>
    %189 = arith.negf %188 : vector<2x32xf32>
    %190 = math.exp %189 : vector<2x32xf32>
    %cst_61 = arith.constant 1.000000e+00 : f32
    %191 = vector.broadcast %cst_61 : f32 to vector<2x32xf32>
    %192 = arith.addf %191, %190 : vector<2x32xf32>
    %193 = arith.divf %191, %192 : vector<2x32xf32>
    %194 = vector.extract_strided_slice %181 {offsets = [0, 64], sizes = [2, 32], strides = [1, 1]} : vector<2x128xf32> to vector<2x32xf32>
    %195 = math.tanh %194 : vector<2x32xf32>
    %196 = vector.extract_strided_slice %181 {offsets = [0, 96], sizes = [2, 32], strides = [1, 1]} : vector<2x128xf32> to vector<2x32xf32>
    %197 = arith.negf %196 : vector<2x32xf32>
    %198 = math.exp %197 : vector<2x32xf32>
    %cst_62 = arith.constant 1.000000e+00 : f32
    %199 = vector.broadcast %cst_62 : f32 to vector<2x32xf32>
    %200 = arith.addf %199, %198 : vector<2x32xf32>
    %201 = arith.divf %199, %200 : vector<2x32xf32>
    %202 = arith.mulf %193, %170 : vector<2x32xf32>
    %203 = arith.mulf %187, %195 : vector<2x32xf32>
    %204 = arith.addf %202, %203 : vector<2x32xf32>
    %205 = math.tanh %204 : vector<2x32xf32>
    %206 = arith.mulf %201, %205 : vector<2x32xf32>
    %207 = vector.extract_strided_slice %206 {offsets = [0, 0], sizes = [2, 16], strides = [1, 1]} : vector<2x32xf32> to vector<2x16xf32>
    %208 = vector.extract_strided_slice %206 {offsets = [0, 16], sizes = [2, 16], strides = [1, 1]} : vector<2x32xf32> to vector<2x16xf32>
    %c10_63 = arith.constant 10 : index
    %c0_64 = arith.constant 0 : index
    %209 = vector.load %arg10[%c10_63, %c0_64] : memref<16x64xf32, #tpu.memory_space<vmem>>, vector<2x16xf32>
    tpu.vector_store %arg10[%c10_63, %c0_64], %207 {strides = array<i32>} : memref<16x64xf32, #tpu.memory_space<vmem>>, vector<2x16xf32>,
    %c4_65 = arith.constant 4 : index
    %c16_66 = arith.constant 16 : index
    %210 = vector.load %arg10[%c4_65, %c16_66] : memref<16x64xf32, #tpu.memory_space<vmem>>, vector<2x16xf32>
    tpu.vector_store %arg10[%c4_65, %c16_66], %208 {strides = array<i32>} : memref<16x64xf32, #tpu.memory_space<vmem>>, vector<2x16xf32>,
    %c4_67 = arith.constant 4 : index
    %c32_68 = arith.constant 32 : index
    %211 = vector.load %arg10[%c4_67, %c32_68] : memref<16x64xf32, #tpu.memory_space<vmem>>, vector<2x16xf32>
    tpu.vector_store %arg10[%c4_67, %c32_68], %207 {strides = array<i32>} : memref<16x64xf32, #tpu.memory_space<vmem>>, vector<2x16xf32>,
    %c10_69 = arith.constant 10 : index
    %c48_70 = arith.constant 48 : index
    %212 = vector.load %arg10[%c10_69, %c48_70] : memref<16x64xf32, #tpu.memory_space<vmem>>, vector<2x16xf32>
    tpu.vector_store %arg10[%c10_69, %c48_70], %208 {strides = array<i32>} : memref<16x64xf32, #tpu.memory_space<vmem>>, vector<2x16xf32>,
    %213 = vector.extract_strided_slice %5 {offsets = [12, 0], sizes = [2, 128], strides = [1, 1]} : vector<16x128xf32> to vector<2x128xf32>
    %cst_71 = arith.constant dense<0.000000e+00> : vector<2x128xf32>
    %214 = tpu.matmul %206, %6, %cst_71 {dimension_numbers = #tpu.dot_dimension_numbers<[1], [0], [0], [1], [0, 0, 1, 1], [], []>} : vector<2x32xf32>, vector<32x128xf32>, vector<2x128xf32> -> vector<2x128xf32>
    %215 = arith.addf %213, %214 : vector<2x128xf32>
    %216 = vector.extract_strided_slice %215 {offsets = [0, 0], sizes = [2, 32], strides = [1, 1]} : vector<2x128xf32> to vector<2x32xf32>
    %217 = arith.negf %216 : vector<2x32xf32>
    %218 = math.exp %217 : vector<2x32xf32>
    %cst_72 = arith.constant 1.000000e+00 : f32
    %219 = vector.broadcast %cst_72 : f32 to vector<2x32xf32>
    %220 = arith.addf %219, %218 : vector<2x32xf32>
    %221 = arith.divf %219, %220 : vector<2x32xf32>
    %222 = vector.extract_strided_slice %215 {offsets = [0, 32], sizes = [2, 32], strides = [1, 1]} : vector<2x128xf32> to vector<2x32xf32>
    %223 = arith.negf %222 : vector<2x32xf32>
    %224 = math.exp %223 : vector<2x32xf32>
    %cst_73 = arith.constant 1.000000e+00 : f32
    %225 = vector.broadcast %cst_73 : f32 to vector<2x32xf32>
    %226 = arith.addf %225, %224 : vector<2x32xf32>
    %227 = arith.divf %225, %226 : vector<2x32xf32>
    %228 = vector.extract_strided_slice %215 {offsets = [0, 64], sizes = [2, 32], strides = [1, 1]} : vector<2x128xf32> to vector<2x32xf32>
    %229 = math.tanh %228 : vector<2x32xf32>
    %230 = vector.extract_strided_slice %215 {offsets = [0, 96], sizes = [2, 32], strides = [1, 1]} : vector<2x128xf32> to vector<2x32xf32>
    %231 = arith.negf %230 : vector<2x32xf32>
    %232 = math.exp %231 : vector<2x32xf32>
    %cst_74 = arith.constant 1.000000e+00 : f32
    %233 = vector.broadcast %cst_74 : f32 to vector<2x32xf32>
    %234 = arith.addf %233, %232 : vector<2x32xf32>
    %235 = arith.divf %233, %234 : vector<2x32xf32>
    %236 = arith.mulf %227, %204 : vector<2x32xf32>
    %237 = arith.mulf %221, %229 : vector<2x32xf32>
    %238 = arith.addf %236, %237 : vector<2x32xf32>
    %239 = math.tanh %238 : vector<2x32xf32>
    %240 = arith.mulf %235, %239 : vector<2x32xf32>
    %241 = vector.extract_strided_slice %240 {offsets = [0, 0], sizes = [2, 16], strides = [1, 1]} : vector<2x32xf32> to vector<2x16xf32>
    %242 = vector.extract_strided_slice %240 {offsets = [0, 16], sizes = [2, 16], strides = [1, 1]} : vector<2x32xf32> to vector<2x16xf32>
    %c12_75 = arith.constant 12 : index
    %c0_76 = arith.constant 0 : index
    %243 = vector.load %arg10[%c12_75, %c0_76] : memref<16x64xf32, #tpu.memory_space<vmem>>, vector<2x16xf32>
    tpu.vector_store %arg10[%c12_75, %c0_76], %241 {strides = array<i32>} : memref<16x64xf32, #tpu.memory_space<vmem>>, vector<2x16xf32>,
    %c2_77 = arith.constant 2 : index
    %c16_78 = arith.constant 16 : index
    %244 = vector.load %arg10[%c2_77, %c16_78] : memref<16x64xf32, #tpu.memory_space<vmem>>, vector<2x16xf32>
    tpu.vector_store %arg10[%c2_77, %c16_78], %242 {strides = array<i32>} : memref<16x64xf32, #tpu.memory_space<vmem>>, vector<2x16xf32>,
    %c2_79 = arith.constant 2 : index
    %c32_80 = arith.constant 32 : index
    %245 = vector.load %arg10[%c2_79, %c32_80] : memref<16x64xf32, #tpu.memory_space<vmem>>, vector<2x16xf32>
    tpu.vector_store %arg10[%c2_79, %c32_80], %241 {strides = array<i32>} : memref<16x64xf32, #tpu.memory_space<vmem>>, vector<2x16xf32>,
    %c12_81 = arith.constant 12 : index
    %c48_82 = arith.constant 48 : index
    %246 = vector.load %arg10[%c12_81, %c48_82] : memref<16x64xf32, #tpu.memory_space<vmem>>, vector<2x16xf32>
    tpu.vector_store %arg10[%c12_81, %c48_82], %242 {strides = array<i32>} : memref<16x64xf32, #tpu.memory_space<vmem>>, vector<2x16xf32>,
    %247 = vector.extract_strided_slice %5 {offsets = [14, 0], sizes = [2, 128], strides = [1, 1]} : vector<16x128xf32> to vector<2x128xf32>
    %cst_83 = arith.constant dense<0.000000e+00> : vector<2x128xf32>
    %248 = tpu.matmul %240, %6, %cst_83 {dimension_numbers = #tpu.dot_dimension_numbers<[1], [0], [0], [1], [0, 0, 1, 1], [], []>} : vector<2x32xf32>, vector<32x128xf32>, vector<2x128xf32> -> vector<2x128xf32>
    %249 = arith.addf %247, %248 : vector<2x128xf32>
    %250 = vector.extract_strided_slice %249 {offsets = [0, 0], sizes = [2, 32], strides = [1, 1]} : vector<2x128xf32> to vector<2x32xf32>
    %251 = arith.negf %250 : vector<2x32xf32>
    %252 = math.exp %251 : vector<2x32xf32>
    %cst_84 = arith.constant 1.000000e+00 : f32
    %253 = vector.broadcast %cst_84 : f32 to vector<2x32xf32>
    %254 = arith.addf %253, %252 : vector<2x32xf32>
    %255 = arith.divf %253, %254 : vector<2x32xf32>
    %256 = vector.extract_strided_slice %249 {offsets = [0, 32], sizes = [2, 32], strides = [1, 1]} : vector<2x128xf32> to vector<2x32xf32>
    %257 = arith.negf %256 : vector<2x32xf32>
    %258 = math.exp %257 : vector<2x32xf32>
    %cst_85 = arith.constant 1.000000e+00 : f32
    %259 = vector.broadcast %cst_85 : f32 to vector<2x32xf32>
    %260 = arith.addf %259, %258 : vector<2x32xf32>
    %261 = arith.divf %259, %260 : vector<2x32xf32>
    %262 = vector.extract_strided_slice %249 {offsets = [0, 64], sizes = [2, 32], strides = [1, 1]} : vector<2x128xf32> to vector<2x32xf32>
    %263 = math.tanh %262 : vector<2x32xf32>
    %264 = vector.extract_strided_slice %249 {offsets = [0, 96], sizes = [2, 32], strides = [1, 1]} : vector<2x128xf32> to vector<2x32xf32>
    %265 = arith.negf %264 : vector<2x32xf32>
    %266 = math.exp %265 : vector<2x32xf32>
    %cst_86 = arith.constant 1.000000e+00 : f32
    %267 = vector.broadcast %cst_86 : f32 to vector<2x32xf32>
    %268 = arith.addf %267, %266 : vector<2x32xf32>
    %269 = arith.divf %267, %268 : vector<2x32xf32>
    %270 = arith.mulf %261, %238 : vector<2x32xf32>
    %271 = arith.mulf %255, %263 : vector<2x32xf32>
    %272 = arith.addf %270, %271 : vector<2x32xf32>
    %273 = math.tanh %272 : vector<2x32xf32>
    %274 = arith.mulf %269, %273 : vector<2x32xf32>
    %275 = vector.extract_strided_slice %274 {offsets = [0, 0], sizes = [2, 16], strides = [1, 1]} : vector<2x32xf32> to vector<2x16xf32>
    %276 = vector.extract_strided_slice %274 {offsets = [0, 16], sizes = [2, 16], strides = [1, 1]} : vector<2x32xf32> to vector<2x16xf32>
    %c14_87 = arith.constant 14 : index
    %c0_88 = arith.constant 0 : index
    %277 = vector.load %arg10[%c14_87, %c0_88] : memref<16x64xf32, #tpu.memory_space<vmem>>, vector<2x16xf32>
    tpu.vector_store %arg10[%c14_87, %c0_88], %275 {strides = array<i32>} : memref<16x64xf32, #tpu.memory_space<vmem>>, vector<2x16xf32>,
    %c0_89 = arith.constant 0 : index
    %c16_90 = arith.constant 16 : index
    %278 = vector.load %arg10[%c0_89, %c16_90] : memref<16x64xf32, #tpu.memory_space<vmem>>, vector<2x16xf32>
    tpu.vector_store %arg10[%c0_89, %c16_90], %276 {strides = array<i32>} : memref<16x64xf32, #tpu.memory_space<vmem>>, vector<2x16xf32>,
    %c0_91 = arith.constant 0 : index
    %c32_92 = arith.constant 32 : index
    %279 = vector.load %arg10[%c0_91, %c32_92] : memref<16x64xf32, #tpu.memory_space<vmem>>, vector<2x16xf32>
    tpu.vector_store %arg10[%c0_91, %c32_92], %275 {strides = array<i32>} : memref<16x64xf32, #tpu.memory_space<vmem>>, vector<2x16xf32>,
    %c14_93 = arith.constant 14 : index
    %c48_94 = arith.constant 48 : index
    %280 = vector.load %arg10[%c14_93, %c48_94] : memref<16x64xf32, #tpu.memory_space<vmem>>, vector<2x16xf32>
    tpu.vector_store %arg10[%c14_93, %c48_94], %276 {strides = array<i32>} : memref<16x64xf32, #tpu.memory_space<vmem>>, vector<2x16xf32>,
    %281 = vector.extract_strided_slice %274 {offsets = [0, 0], sizes = [2, 16], strides = [1, 1]} : vector<2x32xf32> to vector<2x16xf32>
    %c0_95 = arith.constant 0 : index
    %c0_96 = arith.constant 0 : index
    %c0_97 = arith.constant 0 : index
    %282 = vector.load %arg8[%c0_95, %c0_96, %c0_97] : memref<4x2x16xf32, #tpu.memory_space<vmem>>, vector<1x2x16xf32>
    %283 = vector.shape_cast %282 : vector<1x2x16xf32> to vector<2x16xf32>
    %284 = vector.shape_cast %281 : vector<2x16xf32> to vector<1x2x16xf32>
    tpu.vector_store %arg8[%c0_95, %c0_96, %c0_97], %284 {strides = array<i32>} : memref<4x2x16xf32, #tpu.memory_space<vmem>>, vector<1x2x16xf32>,
    %285 = vector.extract_strided_slice %274 {offsets = [0, 16], sizes = [2, 16], strides = [1, 1]} : vector<2x32xf32> to vector<2x16xf32>
    %c1 = arith.constant 1 : index
    %c0_98 = arith.constant 0 : index
    %c0_99 = arith.constant 0 : index
    %286 = vector.load %arg8[%c1, %c0_98, %c0_99] : memref<4x2x16xf32, #tpu.memory_space<vmem>>, vector<1x2x16xf32>
    %287 = vector.shape_cast %286 : vector<1x2x16xf32> to vector<2x16xf32>
    %288 = vector.shape_cast %285 : vector<2x16xf32> to vector<1x2x16xf32>
    tpu.vector_store %arg8[%c1, %c0_98, %c0_99], %288 {strides = array<i32>} : memref<4x2x16xf32, #tpu.memory_space<vmem>>, vector<1x2x16xf32>,
    %289 = vector.extract_strided_slice %272 {offsets = [0, 0], sizes = [2, 16], strides = [1, 1]} : vector<2x32xf32> to vector<2x16xf32>
    %c0_100 = arith.constant 0 : index
    %c0_101 = arith.constant 0 : index
    %c0_102 = arith.constant 0 : index
    %290 = vector.load %arg9[%c0_100, %c0_101, %c0_102] : memref<4x2x16xf32, #tpu.memory_space<vmem>>, vector<1x2x16xf32>
    %291 = vector.shape_cast %290 : vector<1x2x16xf32> to vector<2x16xf32>
    %292 = vector.shape_cast %289 : vector<2x16xf32> to vector<1x2x16xf32>
    tpu.vector_store %arg9[%c0_100, %c0_101, %c0_102], %292 {strides = array<i32>} : memref<4x2x16xf32, #tpu.memory_space<vmem>>, vector<1x2x16xf32>,
    %293 = vector.extract_strided_slice %272 {offsets = [0, 16], sizes = [2, 16], strides = [1, 1]} : vector<2x32xf32> to vector<2x16xf32>
    %c1_103 = arith.constant 1 : index
    %c0_104 = arith.constant 0 : index
    %c0_105 = arith.constant 0 : index
    %294 = vector.load %arg9[%c1_103, %c0_104, %c0_105] : memref<4x2x16xf32, #tpu.memory_space<vmem>>, vector<1x2x16xf32>
    %295 = vector.shape_cast %294 : vector<1x2x16xf32> to vector<2x16xf32>
    %296 = vector.shape_cast %293 : vector<2x16xf32> to vector<1x2x16xf32>
    tpu.vector_store %arg9[%c1_103, %c0_104, %c0_105], %296 {strides = array<i32>} : memref<4x2x16xf32, #tpu.memory_space<vmem>>, vector<1x2x16xf32>,
    %c0_106 = arith.constant 0 : index
    %c0_107 = arith.constant 0 : index
    %297 = vector.load %arg10[%c0_106, %c0_107] : memref<16x64xf32, #tpu.memory_space<vmem>>, vector<16x64xf32>
    %c0_108 = arith.constant 0 : index
    %c0_109 = arith.constant 0 : index
    %298 = vector.load %arg4[%c0_108, %c0_109] : memref<64x128xf32, #tpu.memory_space<vmem>>, vector<64x128xf32>
    %cst_110 = arith.constant dense<0.000000e+00> : vector<16x128xf32>
    %299 = tpu.matmul %297, %298, %cst_110 {dimension_numbers = #tpu.dot_dimension_numbers<[1], [0], [0], [1], [0, 0, 1, 1], [], []>} : vector<16x64xf32>, vector<64x128xf32>, vector<16x128xf32> -> vector<16x128xf32>
    %c0_111 = arith.constant 0 : index
    %c0_112 = arith.constant 0 : index
    %300 = vector.load %arg6[%c0_111, %c0_112] : memref<1x128xf32, #tpu.memory_space<vmem>>, vector<1x128xf32>
    %301 = vector.broadcast %300 : vector<1x128xf32> to vector<16x128xf32>
    %302 = arith.addf %299, %301 : vector<16x128xf32>
    %c0_113 = arith.constant 0 : index
    %c0_114 = arith.constant 0 : index
    %303 = vector.load %arg5[%c0_113, %c0_114] : memref<32x128xf32, #tpu.memory_space<vmem>>, vector<32x128xf32>
    %cst_115 = arith.constant 0.000000e+00 : f32
    %304 = vector.broadcast %cst_115 : f32 to vector<2x32xf32>
    %cst_116 = arith.constant 0.000000e+00 : f32
    %305 = vector.broadcast %cst_116 : f32 to vector<2x32xf32>
    %306 = vector.extract_strided_slice %302 {offsets = [0, 0], sizes = [2, 128], strides = [1, 1]} : vector<16x128xf32> to vector<2x128xf32>
    %cst_117 = arith.constant dense<0.000000e+00> : vector<2x128xf32>
    %307 = tpu.matmul %304, %303, %cst_117 {dimension_numbers = #tpu.dot_dimension_numbers<[1], [0], [0], [1], [0, 0, 1, 1], [], []>} : vector<2x32xf32>, vector<32x128xf32>, vector<2x128xf32> -> vector<2x128xf32>
    %308 = arith.addf %306, %307 : vector<2x128xf32>
    %309 = vector.extract_strided_slice %308 {offsets = [0, 0], sizes = [2, 32], strides = [1, 1]} : vector<2x128xf32> to vector<2x32xf32>
    %310 = arith.negf %309 : vector<2x32xf32>
    %311 = math.exp %310 : vector<2x32xf32>
    %cst_118 = arith.constant 1.000000e+00 : f32
    %312 = vector.broadcast %cst_118 : f32 to vector<2x32xf32>
    %313 = arith.addf %312, %311 : vector<2x32xf32>
    %314 = arith.divf %312, %313 : vector<2x32xf32>
    %315 = vector.extract_strided_slice %308 {offsets = [0, 32], sizes = [2, 32], strides = [1, 1]} : vector<2x128xf32> to vector<2x32xf32>
    %316 = arith.negf %315 : vector<2x32xf32>
    %317 = math.exp %316 : vector<2x32xf32>
    %cst_119 = arith.constant 1.000000e+00 : f32
    %318 = vector.broadcast %cst_119 : f32 to vector<2x32xf32>
    %319 = arith.addf %318, %317 : vector<2x32xf32>
    %320 = arith.divf %318, %319 : vector<2x32xf32>
    %321 = vector.extract_strided_slice %308 {offsets = [0, 64], sizes = [2, 32], strides = [1, 1]} : vector<2x128xf32> to vector<2x32xf32>
    %322 = math.tanh %321 : vector<2x32xf32>
    %323 = vector.extract_strided_slice %308 {offsets = [0, 96], sizes = [2, 32], strides = [1, 1]} : vector<2x128xf32> to vector<2x32xf32>
    %324 = arith.negf %323 : vector<2x32xf32>
    %325 = math.exp %324 : vector<2x32xf32>
    %cst_120 = arith.constant 1.000000e+00 : f32
    %326 = vector.broadcast %cst_120 : f32 to vector<2x32xf32>
    %327 = arith.addf %326, %325 : vector<2x32xf32>
    %328 = arith.divf %326, %327 : vector<2x32xf32>
    %329 = arith.mulf %320, %305 : vector<2x32xf32>
    %330 = arith.mulf %314, %322 : vector<2x32xf32>
    %331 = arith.addf %329, %330 : vector<2x32xf32>
    %332 = math.tanh %331 : vector<2x32xf32>
    %333 = arith.mulf %328, %332 : vector<2x32xf32>
    %334 = vector.extract_strided_slice %333 {offsets = [0, 0], sizes = [2, 16], strides = [1, 1]} : vector<2x32xf32> to vector<2x16xf32>
    %c0_121 = arith.constant 0 : index
    %c0_122 = arith.constant 0 : index
    %335 = vector.load %arg7[%c0_121, %c0_122] : memref<16x32xf32, #tpu.memory_space<vmem>>, vector<2x16xf32>
    tpu.vector_store %arg7[%c0_121, %c0_122], %334 {strides = array<i32>} : memref<16x32xf32, #tpu.memory_space<vmem>>, vector<2x16xf32>,
    %336 = vector.extract_strided_slice %333 {offsets = [0, 16], sizes = [2, 16], strides = [1, 1]} : vector<2x32xf32> to vector<2x16xf32>
    %c14_123 = arith.constant 14 : index
    %c16_124 = arith.constant 16 : index
    %337 = vector.load %arg7[%c14_123, %c16_124] : memref<16x32xf32, #tpu.memory_space<vmem>>, vector<2x16xf32>
    tpu.vector_store %arg7[%c14_123, %c16_124], %336 {strides = array<i32>} : memref<16x32xf32, #tpu.memory_space<vmem>>, vector<2x16xf32>,
    %338 = vector.extract_strided_slice %302 {offsets = [2, 0], sizes = [2, 128], strides = [1, 1]} : vector<16x128xf32> to vector<2x128xf32>
    %cst_125 = arith.constant dense<0.000000e+00> : vector<2x128xf32>
    %339 = tpu.matmul %333, %303, %cst_125 {dimension_numbers = #tpu.dot_dimension_numbers<[1], [0], [0], [1], [0, 0, 1, 1], [], []>} : vector<2x32xf32>, vector<32x128xf32>, vector<2x128xf32> -> vector<2x128xf32>
    %340 = arith.addf %338, %339 : vector<2x128xf32>
    %341 = vector.extract_strided_slice %340 {offsets = [0, 0], sizes = [2, 32], strides = [1, 1]} : vector<2x128xf32> to vector<2x32xf32>
    %342 = arith.negf %341 : vector<2x32xf32>
    %343 = math.exp %342 : vector<2x32xf32>
    %cst_126 = arith.constant 1.000000e+00 : f32
    %344 = vector.broadcast %cst_126 : f32 to vector<2x32xf32>
    %345 = arith.addf %344, %343 : vector<2x32xf32>
    %346 = arith.divf %344, %345 : vector<2x32xf32>
    %347 = vector.extract_strided_slice %340 {offsets = [0, 32], sizes = [2, 32], strides = [1, 1]} : vector<2x128xf32> to vector<2x32xf32>
    %348 = arith.negf %347 : vector<2x32xf32>
    %349 = math.exp %348 : vector<2x32xf32>
    %cst_127 = arith.constant 1.000000e+00 : f32
    %350 = vector.broadcast %cst_127 : f32 to vector<2x32xf32>
    %351 = arith.addf %350, %349 : vector<2x32xf32>
    %352 = arith.divf %350, %351 : vector<2x32xf32>
    %353 = vector.extract_strided_slice %340 {offsets = [0, 64], sizes = [2, 32], strides = [1, 1]} : vector<2x128xf32> to vector<2x32xf32>
    %354 = math.tanh %353 : vector<2x32xf32>
    %355 = vector.extract_strided_slice %340 {offsets = [0, 96], sizes = [2, 32], strides = [1, 1]} : vector<2x128xf32> to vector<2x32xf32>
    %356 = arith.negf %355 : vector<2x32xf32>
    %357 = math.exp %356 : vector<2x32xf32>
    %cst_128 = arith.constant 1.000000e+00 : f32
    %358 = vector.broadcast %cst_128 : f32 to vector<2x32xf32>
    %359 = arith.addf %358, %357 : vector<2x32xf32>
    %360 = arith.divf %358, %359 : vector<2x32xf32>
    %361 = arith.mulf %352, %331 : vector<2x32xf32>
    %362 = arith.mulf %346, %354 : vector<2x32xf32>
    %363 = arith.addf %361, %362 : vector<2x32xf32>
    %364 = math.tanh %363 : vector<2x32xf32>
    %365 = arith.mulf %360, %364 : vector<2x32xf32>
    %366 = vector.extract_strided_slice %365 {offsets = [0, 0], sizes = [2, 16], strides = [1, 1]} : vector<2x32xf32> to vector<2x16xf32>
    %c2_129 = arith.constant 2 : index
    %c0_130 = arith.constant 0 : index
    %367 = vector.load %arg7[%c2_129, %c0_130] : memref<16x32xf32, #tpu.memory_space<vmem>>, vector<2x16xf32>
    tpu.vector_store %arg7[%c2_129, %c0_130], %366 {strides = array<i32>} : memref<16x32xf32, #tpu.memory_space<vmem>>, vector<2x16xf32>,
    %368 = vector.extract_strided_slice %365 {offsets = [0, 16], sizes = [2, 16], strides = [1, 1]} : vector<2x32xf32> to vector<2x16xf32>
    %c12_131 = arith.constant 12 : index
    %c16_132 = arith.constant 16 : index
    %369 = vector.load %arg7[%c12_131, %c16_132] : memref<16x32xf32, #tpu.memory_space<vmem>>, vector<2x16xf32>
    tpu.vector_store %arg7[%c12_131, %c16_132], %368 {strides = array<i32>} : memref<16x32xf32, #tpu.memory_space<vmem>>, vector<2x16xf32>,
    %370 = vector.extract_strided_slice %302 {offsets = [4, 0], sizes = [2, 128], strides = [1, 1]} : vector<16x128xf32> to vector<2x128xf32>
    %cst_133 = arith.constant dense<0.000000e+00> : vector<2x128xf32>
    %371 = tpu.matmul %365, %303, %cst_133 {dimension_numbers = #tpu.dot_dimension_numbers<[1], [0], [0], [1], [0, 0, 1, 1], [], []>} : vector<2x32xf32>, vector<32x128xf32>, vector<2x128xf32> -> vector<2x128xf32>
    %372 = arith.addf %370, %371 : vector<2x128xf32>
    %373 = vector.extract_strided_slice %372 {offsets = [0, 0], sizes = [2, 32], strides = [1, 1]} : vector<2x128xf32> to vector<2x32xf32>
    %374 = arith.negf %373 : vector<2x32xf32>
    %375 = math.exp %374 : vector<2x32xf32>
    %cst_134 = arith.constant 1.000000e+00 : f32
    %376 = vector.broadcast %cst_134 : f32 to vector<2x32xf32>
    %377 = arith.addf %376, %375 : vector<2x32xf32>
    %378 = arith.divf %376, %377 : vector<2x32xf32>
    %379 = vector.extract_strided_slice %372 {offsets = [0, 32], sizes = [2, 32], strides = [1, 1]} : vector<2x128xf32> to vector<2x32xf32>
    %380 = arith.negf %379 : vector<2x32xf32>
    %381 = math.exp %380 : vector<2x32xf32>
    %cst_135 = arith.constant 1.000000e+00 : f32
    %382 = vector.broadcast %cst_135 : f32 to vector<2x32xf32>
    %383 = arith.addf %382, %381 : vector<2x32xf32>
    %384 = arith.divf %382, %383 : vector<2x32xf32>
    %385 = vector.extract_strided_slice %372 {offsets = [0, 64], sizes = [2, 32], strides = [1, 1]} : vector<2x128xf32> to vector<2x32xf32>
    %386 = math.tanh %385 : vector<2x32xf32>
    %387 = vector.extract_strided_slice %372 {offsets = [0, 96], sizes = [2, 32], strides = [1, 1]} : vector<2x128xf32> to vector<2x32xf32>
    %388 = arith.negf %387 : vector<2x32xf32>
    %389 = math.exp %388 : vector<2x32xf32>
    %cst_136 = arith.constant 1.000000e+00 : f32
    %390 = vector.broadcast %cst_136 : f32 to vector<2x32xf32>
    %391 = arith.addf %390, %389 : vector<2x32xf32>
    %392 = arith.divf %390, %391 : vector<2x32xf32>
    %393 = arith.mulf %384, %363 : vector<2x32xf32>
    %394 = arith.mulf %378, %386 : vector<2x32xf32>
    %395 = arith.addf %393, %394 : vector<2x32xf32>
    %396 = math.tanh %395 : vector<2x32xf32>
    %397 = arith.mulf %392, %396 : vector<2x32xf32>
    %398 = vector.extract_strided_slice %397 {offsets = [0, 0], sizes = [2, 16], strides = [1, 1]} : vector<2x32xf32> to vector<2x16xf32>
    %c4_137 = arith.constant 4 : index
    %c0_138 = arith.constant 0 : index
    %399 = vector.load %arg7[%c4_137, %c0_138] : memref<16x32xf32, #tpu.memory_space<vmem>>, vector<2x16xf32>
    tpu.vector_store %arg7[%c4_137, %c0_138], %398 {strides = array<i32>} : memref<16x32xf32, #tpu.memory_space<vmem>>, vector<2x16xf32>,
    %400 = vector.extract_strided_slice %397 {offsets = [0, 16], sizes = [2, 16], strides = [1, 1]} : vector<2x32xf32> to vector<2x16xf32>
    %c10_139 = arith.constant 10 : index
    %c16_140 = arith.constant 16 : index
    %401 = vector.load %arg7[%c10_139, %c16_140] : memref<16x32xf32, #tpu.memory_space<vmem>>, vector<2x16xf32>
    tpu.vector_store %arg7[%c10_139, %c16_140], %400 {strides = array<i32>} : memref<16x32xf32, #tpu.memory_space<vmem>>, vector<2x16xf32>,
    %402 = vector.extract_strided_slice %302 {offsets = [6, 0], sizes = [2, 128], strides = [1, 1]} : vector<16x128xf32> to vector<2x128xf32>
    %cst_141 = arith.constant dense<0.000000e+00> : vector<2x128xf32>
    %403 = tpu.matmul %397, %303, %cst_141 {dimension_numbers = #tpu.dot_dimension_numbers<[1], [0], [0], [1], [0, 0, 1, 1], [], []>} : vector<2x32xf32>, vector<32x128xf32>, vector<2x128xf32> -> vector<2x128xf32>
    %404 = arith.addf %402, %403 : vector<2x128xf32>
    %405 = vector.extract_strided_slice %404 {offsets = [0, 0], sizes = [2, 32], strides = [1, 1]} : vector<2x128xf32> to vector<2x32xf32>
    %406 = arith.negf %405 : vector<2x32xf32>
    %407 = math.exp %406 : vector<2x32xf32>
    %cst_142 = arith.constant 1.000000e+00 : f32
    %408 = vector.broadcast %cst_142 : f32 to vector<2x32xf32>
    %409 = arith.addf %408, %407 : vector<2x32xf32>
    %410 = arith.divf %408, %409 : vector<2x32xf32>
    %411 = vector.extract_strided_slice %404 {offsets = [0, 32], sizes = [2, 32], strides = [1, 1]} : vector<2x128xf32> to vector<2x32xf32>
    %412 = arith.negf %411 : vector<2x32xf32>
    %413 = math.exp %412 : vector<2x32xf32>
    %cst_143 = arith.constant 1.000000e+00 : f32
    %414 = vector.broadcast %cst_143 : f32 to vector<2x32xf32>
    %415 = arith.addf %414, %413 : vector<2x32xf32>
    %416 = arith.divf %414, %415 : vector<2x32xf32>
    %417 = vector.extract_strided_slice %404 {offsets = [0, 64], sizes = [2, 32], strides = [1, 1]} : vector<2x128xf32> to vector<2x32xf32>
    %418 = math.tanh %417 : vector<2x32xf32>
    %419 = vector.extract_strided_slice %404 {offsets = [0, 96], sizes = [2, 32], strides = [1, 1]} : vector<2x128xf32> to vector<2x32xf32>
    %420 = arith.negf %419 : vector<2x32xf32>
    %421 = math.exp %420 : vector<2x32xf32>
    %cst_144 = arith.constant 1.000000e+00 : f32
    %422 = vector.broadcast %cst_144 : f32 to vector<2x32xf32>
    %423 = arith.addf %422, %421 : vector<2x32xf32>
    %424 = arith.divf %422, %423 : vector<2x32xf32>
    %425 = arith.mulf %416, %395 : vector<2x32xf32>
    %426 = arith.mulf %410, %418 : vector<2x32xf32>
    %427 = arith.addf %425, %426 : vector<2x32xf32>
    %428 = math.tanh %427 : vector<2x32xf32>
    %429 = arith.mulf %424, %428 : vector<2x32xf32>
    %430 = vector.extract_strided_slice %429 {offsets = [0, 0], sizes = [2, 16], strides = [1, 1]} : vector<2x32xf32> to vector<2x16xf32>
    %c6_145 = arith.constant 6 : index
    %c0_146 = arith.constant 0 : index
    %431 = vector.load %arg7[%c6_145, %c0_146] : memref<16x32xf32, #tpu.memory_space<vmem>>, vector<2x16xf32>
    tpu.vector_store %arg7[%c6_145, %c0_146], %430 {strides = array<i32>} : memref<16x32xf32, #tpu.memory_space<vmem>>, vector<2x16xf32>,
    %432 = vector.extract_strided_slice %429 {offsets = [0, 16], sizes = [2, 16], strides = [1, 1]} : vector<2x32xf32> to vector<2x16xf32>
    %c8_147 = arith.constant 8 : index
    %c16_148 = arith.constant 16 : index
    %433 = vector.load %arg7[%c8_147, %c16_148] : memref<16x32xf32, #tpu.memory_space<vmem>>, vector<2x16xf32>
    tpu.vector_store %arg7[%c8_147, %c16_148], %432 {strides = array<i32>} : memref<16x32xf32, #tpu.memory_space<vmem>>, vector<2x16xf32>,
    %434 = vector.extract_strided_slice %302 {offsets = [8, 0], sizes = [2, 128], strides = [1, 1]} : vector<16x128xf32> to vector<2x128xf32>
    %cst_149 = arith.constant dense<0.000000e+00> : vector<2x128xf32>
    %435 = tpu.matmul %429, %303, %cst_149 {dimension_numbers = #tpu.dot_dimension_numbers<[1], [0], [0], [1], [0, 0, 1, 1], [], []>} : vector<2x32xf32>, vector<32x128xf32>, vector<2x128xf32> -> vector<2x128xf32>
    %436 = arith.addf %434, %435 : vector<2x128xf32>
    %437 = vector.extract_strided_slice %436 {offsets = [0, 0], sizes = [2, 32], strides = [1, 1]} : vector<2x128xf32> to vector<2x32xf32>
    %438 = arith.negf %437 : vector<2x32xf32>
    %439 = math.exp %438 : vector<2x32xf32>
    %cst_150 = arith.constant 1.000000e+00 : f32
    %440 = vector.broadcast %cst_150 : f32 to vector<2x32xf32>
    %441 = arith.addf %440, %439 : vector<2x32xf32>
    %442 = arith.divf %440, %441 : vector<2x32xf32>
    %443 = vector.extract_strided_slice %436 {offsets = [0, 32], sizes = [2, 32], strides = [1, 1]} : vector<2x128xf32> to vector<2x32xf32>
    %444 = arith.negf %443 : vector<2x32xf32>
    %445 = math.exp %444 : vector<2x32xf32>
    %cst_151 = arith.constant 1.000000e+00 : f32
    %446 = vector.broadcast %cst_151 : f32 to vector<2x32xf32>
    %447 = arith.addf %446, %445 : vector<2x32xf32>
    %448 = arith.divf %446, %447 : vector<2x32xf32>
    %449 = vector.extract_strided_slice %436 {offsets = [0, 64], sizes = [2, 32], strides = [1, 1]} : vector<2x128xf32> to vector<2x32xf32>
    %450 = math.tanh %449 : vector<2x32xf32>
    %451 = vector.extract_strided_slice %436 {offsets = [0, 96], sizes = [2, 32], strides = [1, 1]} : vector<2x128xf32> to vector<2x32xf32>
    %452 = arith.negf %451 : vector<2x32xf32>
    %453 = math.exp %452 : vector<2x32xf32>
    %cst_152 = arith.constant 1.000000e+00 : f32
    %454 = vector.broadcast %cst_152 : f32 to vector<2x32xf32>
    %455 = arith.addf %454, %453 : vector<2x32xf32>
    %456 = arith.divf %454, %455 : vector<2x32xf32>
    %457 = arith.mulf %448, %427 : vector<2x32xf32>
    %458 = arith.mulf %442, %450 : vector<2x32xf32>
    %459 = arith.addf %457, %458 : vector<2x32xf32>
    %460 = math.tanh %459 : vector<2x32xf32>
    %461 = arith.mulf %456, %460 : vector<2x32xf32>
    %462 = vector.extract_strided_slice %461 {offsets = [0, 0], sizes = [2, 16], strides = [1, 1]} : vector<2x32xf32> to vector<2x16xf32>
    %c8_153 = arith.constant 8 : index
    %c0_154 = arith.constant 0 : index
    %463 = vector.load %arg7[%c8_153, %c0_154] : memref<16x32xf32, #tpu.memory_space<vmem>>, vector<2x16xf32>
    tpu.vector_store %arg7[%c8_153, %c0_154], %462 {strides = array<i32>} : memref<16x32xf32, #tpu.memory_space<vmem>>, vector<2x16xf32>,
    %464 = vector.extract_strided_slice %461 {offsets = [0, 16], sizes = [2, 16], strides = [1, 1]} : vector<2x32xf32> to vector<2x16xf32>
    %c6_155 = arith.constant 6 : index
    %c16_156 = arith.constant 16 : index
    %465 = vector.load %arg7[%c6_155, %c16_156] : memref<16x32xf32, #tpu.memory_space<vmem>>, vector<2x16xf32>
    tpu.vector_store %arg7[%c6_155, %c16_156], %464 {strides = array<i32>} : memref<16x32xf32, #tpu.memory_space<vmem>>, vector<2x16xf32>,
    %466 = vector.extract_strided_slice %302 {offsets = [10, 0], sizes = [2, 128], strides = [1, 1]} : vector<16x128xf32> to vector<2x128xf32>
    %cst_157 = arith.constant dense<0.000000e+00> : vector<2x128xf32>
    %467 = tpu.matmul %461, %303, %cst_157 {dimension_numbers = #tpu.dot_dimension_numbers<[1], [0], [0], [1], [0, 0, 1, 1], [], []>} : vector<2x32xf32>, vector<32x128xf32>, vector<2x128xf32> -> vector<2x128xf32>
    %468 = arith.addf %466, %467 : vector<2x128xf32>
    %469 = vector.extract_strided_slice %468 {offsets = [0, 0], sizes = [2, 32], strides = [1, 1]} : vector<2x128xf32> to vector<2x32xf32>
    %470 = arith.negf %469 : vector<2x32xf32>
    %471 = math.exp %470 : vector<2x32xf32>
    %cst_158 = arith.constant 1.000000e+00 : f32
    %472 = vector.broadcast %cst_158 : f32 to vector<2x32xf32>
    %473 = arith.addf %472, %471 : vector<2x32xf32>
    %474 = arith.divf %472, %473 : vector<2x32xf32>
    %475 = vector.extract_strided_slice %468 {offsets = [0, 32], sizes = [2, 32], strides = [1, 1]} : vector<2x128xf32> to vector<2x32xf32>
    %476 = arith.negf %475 : vector<2x32xf32>
    %477 = math.exp %476 : vector<2x32xf32>
    %cst_159 = arith.constant 1.000000e+00 : f32
    %478 = vector.broadcast %cst_159 : f32 to vector<2x32xf32>
    %479 = arith.addf %478, %477 : vector<2x32xf32>
    %480 = arith.divf %478, %479 : vector<2x32xf32>
    %481 = vector.extract_strided_slice %468 {offsets = [0, 64], sizes = [2, 32], strides = [1, 1]} : vector<2x128xf32> to vector<2x32xf32>
    %482 = math.tanh %481 : vector<2x32xf32>
    %483 = vector.extract_strided_slice %468 {offsets = [0, 96], sizes = [2, 32], strides = [1, 1]} : vector<2x128xf32> to vector<2x32xf32>
    %484 = arith.negf %483 : vector<2x32xf32>
    %485 = math.exp %484 : vector<2x32xf32>
    %cst_160 = arith.constant 1.000000e+00 : f32
    %486 = vector.broadcast %cst_160 : f32 to vector<2x32xf32>
    %487 = arith.addf %486, %485 : vector<2x32xf32>
    %488 = arith.divf %486, %487 : vector<2x32xf32>
    %489 = arith.mulf %480, %459 : vector<2x32xf32>
    %490 = arith.mulf %474, %482 : vector<2x32xf32>
    %491 = arith.addf %489, %490 : vector<2x32xf32>
    %492 = math.tanh %491 : vector<2x32xf32>
    %493 = arith.mulf %488, %492 : vector<2x32xf32>
    %494 = vector.extract_strided_slice %493 {offsets = [0, 0], sizes = [2, 16], strides = [1, 1]} : vector<2x32xf32> to vector<2x16xf32>
    %c10_161 = arith.constant 10 : index
    %c0_162 = arith.constant 0 : index
    %495 = vector.load %arg7[%c10_161, %c0_162] : memref<16x32xf32, #tpu.memory_space<vmem>>, vector<2x16xf32>
    tpu.vector_store %arg7[%c10_161, %c0_162], %494 {strides = array<i32>} : memref<16x32xf32, #tpu.memory_space<vmem>>, vector<2x16xf32>,
    %496 = vector.extract_strided_slice %493 {offsets = [0, 16], sizes = [2, 16], strides = [1, 1]} : vector<2x32xf32> to vector<2x16xf32>
    %c4_163 = arith.constant 4 : index
    %c16_164 = arith.constant 16 : index
    %497 = vector.load %arg7[%c4_163, %c16_164] : memref<16x32xf32, #tpu.memory_space<vmem>>, vector<2x16xf32>
    tpu.vector_store %arg7[%c4_163, %c16_164], %496 {strides = array<i32>} : memref<16x32xf32, #tpu.memory_space<vmem>>, vector<2x16xf32>,
    %498 = vector.extract_strided_slice %302 {offsets = [12, 0], sizes = [2, 128], strides = [1, 1]} : vector<16x128xf32> to vector<2x128xf32>
    %cst_165 = arith.constant dense<0.000000e+00> : vector<2x128xf32>
    %499 = tpu.matmul %493, %303, %cst_165 {dimension_numbers = #tpu.dot_dimension_numbers<[1], [0], [0], [1], [0, 0, 1, 1], [], []>} : vector<2x32xf32>, vector<32x128xf32>, vector<2x128xf32> -> vector<2x128xf32>
    %500 = arith.addf %498, %499 : vector<2x128xf32>
    %501 = vector.extract_strided_slice %500 {offsets = [0, 0], sizes = [2, 32], strides = [1, 1]} : vector<2x128xf32> to vector<2x32xf32>
    %502 = arith.negf %501 : vector<2x32xf32>
    %503 = math.exp %502 : vector<2x32xf32>
    %cst_166 = arith.constant 1.000000e+00 : f32
    %504 = vector.broadcast %cst_166 : f32 to vector<2x32xf32>
    %505 = arith.addf %504, %503 : vector<2x32xf32>
    %506 = arith.divf %504, %505 : vector<2x32xf32>
    %507 = vector.extract_strided_slice %500 {offsets = [0, 32], sizes = [2, 32], strides = [1, 1]} : vector<2x128xf32> to vector<2x32xf32>
    %508 = arith.negf %507 : vector<2x32xf32>
    %509 = math.exp %508 : vector<2x32xf32>
    %cst_167 = arith.constant 1.000000e+00 : f32
    %510 = vector.broadcast %cst_167 : f32 to vector<2x32xf32>
    %511 = arith.addf %510, %509 : vector<2x32xf32>
    %512 = arith.divf %510, %511 : vector<2x32xf32>
    %513 = vector.extract_strided_slice %500 {offsets = [0, 64], sizes = [2, 32], strides = [1, 1]} : vector<2x128xf32> to vector<2x32xf32>
    %514 = math.tanh %513 : vector<2x32xf32>
    %515 = vector.extract_strided_slice %500 {offsets = [0, 96], sizes = [2, 32], strides = [1, 1]} : vector<2x128xf32> to vector<2x32xf32>
    %516 = arith.negf %515 : vector<2x32xf32>
    %517 = math.exp %516 : vector<2x32xf32>
    %cst_168 = arith.constant 1.000000e+00 : f32
    %518 = vector.broadcast %cst_168 : f32 to vector<2x32xf32>
    %519 = arith.addf %518, %517 : vector<2x32xf32>
    %520 = arith.divf %518, %519 : vector<2x32xf32>
    %521 = arith.mulf %512, %491 : vector<2x32xf32>
    %522 = arith.mulf %506, %514 : vector<2x32xf32>
    %523 = arith.addf %521, %522 : vector<2x32xf32>
    %524 = math.tanh %523 : vector<2x32xf32>
    %525 = arith.mulf %520, %524 : vector<2x32xf32>
    %526 = vector.extract_strided_slice %525 {offsets = [0, 0], sizes = [2, 16], strides = [1, 1]} : vector<2x32xf32> to vector<2x16xf32>
    %c12_169 = arith.constant 12 : index
    %c0_170 = arith.constant 0 : index
    %527 = vector.load %arg7[%c12_169, %c0_170] : memref<16x32xf32, #tpu.memory_space<vmem>>, vector<2x16xf32>
    tpu.vector_store %arg7[%c12_169, %c0_170], %526 {strides = array<i32>} : memref<16x32xf32, #tpu.memory_space<vmem>>, vector<2x16xf32>,
    %528 = vector.extract_strided_slice %525 {offsets = [0, 16], sizes = [2, 16], strides = [1, 1]} : vector<2x32xf32> to vector<2x16xf32>
    %c2_171 = arith.constant 2 : index
    %c16_172 = arith.constant 16 : index
    %529 = vector.load %arg7[%c2_171, %c16_172] : memref<16x32xf32, #tpu.memory_space<vmem>>, vector<2x16xf32>
    tpu.vector_store %arg7[%c2_171, %c16_172], %528 {strides = array<i32>} : memref<16x32xf32, #tpu.memory_space<vmem>>, vector<2x16xf32>,
    %530 = vector.extract_strided_slice %302 {offsets = [14, 0], sizes = [2, 128], strides = [1, 1]} : vector<16x128xf32> to vector<2x128xf32>
    %cst_173 = arith.constant dense<0.000000e+00> : vector<2x128xf32>
    %531 = tpu.matmul %525, %303, %cst_173 {dimension_numbers = #tpu.dot_dimension_numbers<[1], [0], [0], [1], [0, 0, 1, 1], [], []>} : vector<2x32xf32>, vector<32x128xf32>, vector<2x128xf32> -> vector<2x128xf32>
    %532 = arith.addf %530, %531 : vector<2x128xf32>
    %533 = vector.extract_strided_slice %532 {offsets = [0, 0], sizes = [2, 32], strides = [1, 1]} : vector<2x128xf32> to vector<2x32xf32>
    %534 = arith.negf %533 : vector<2x32xf32>
    %535 = math.exp %534 : vector<2x32xf32>
    %cst_174 = arith.constant 1.000000e+00 : f32
    %536 = vector.broadcast %cst_174 : f32 to vector<2x32xf32>
    %537 = arith.addf %536, %535 : vector<2x32xf32>
    %538 = arith.divf %536, %537 : vector<2x32xf32>
    %539 = vector.extract_strided_slice %532 {offsets = [0, 32], sizes = [2, 32], strides = [1, 1]} : vector<2x128xf32> to vector<2x32xf32>
    %540 = arith.negf %539 : vector<2x32xf32>
    %541 = math.exp %540 : vector<2x32xf32>
    %cst_175 = arith.constant 1.000000e+00 : f32
    %542 = vector.broadcast %cst_175 : f32 to vector<2x32xf32>
    %543 = arith.addf %542, %541 : vector<2x32xf32>
    %544 = arith.divf %542, %543 : vector<2x32xf32>
    %545 = vector.extract_strided_slice %532 {offsets = [0, 64], sizes = [2, 32], strides = [1, 1]} : vector<2x128xf32> to vector<2x32xf32>
    %546 = math.tanh %545 : vector<2x32xf32>
    %547 = vector.extract_strided_slice %532 {offsets = [0, 96], sizes = [2, 32], strides = [1, 1]} : vector<2x128xf32> to vector<2x32xf32>
    %548 = arith.negf %547 : vector<2x32xf32>
    %549 = math.exp %548 : vector<2x32xf32>
    %cst_176 = arith.constant 1.000000e+00 : f32
    %550 = vector.broadcast %cst_176 : f32 to vector<2x32xf32>
    %551 = arith.addf %550, %549 : vector<2x32xf32>
    %552 = arith.divf %550, %551 : vector<2x32xf32>
    %553 = arith.mulf %544, %523 : vector<2x32xf32>
    %554 = arith.mulf %538, %546 : vector<2x32xf32>
    %555 = arith.addf %553, %554 : vector<2x32xf32>
    %556 = math.tanh %555 : vector<2x32xf32>
    %557 = arith.mulf %552, %556 : vector<2x32xf32>
    %558 = vector.extract_strided_slice %557 {offsets = [0, 0], sizes = [2, 16], strides = [1, 1]} : vector<2x32xf32> to vector<2x16xf32>
    %c14_177 = arith.constant 14 : index
    %c0_178 = arith.constant 0 : index
    %559 = vector.load %arg7[%c14_177, %c0_178] : memref<16x32xf32, #tpu.memory_space<vmem>>, vector<2x16xf32>
    tpu.vector_store %arg7[%c14_177, %c0_178], %558 {strides = array<i32>} : memref<16x32xf32, #tpu.memory_space<vmem>>, vector<2x16xf32>,
    %560 = vector.extract_strided_slice %557 {offsets = [0, 16], sizes = [2, 16], strides = [1, 1]} : vector<2x32xf32> to vector<2x16xf32>
    %c0_179 = arith.constant 0 : index
    %c16_180 = arith.constant 16 : index
    %561 = vector.load %arg7[%c0_179, %c16_180] : memref<16x32xf32, #tpu.memory_space<vmem>>, vector<2x16xf32>
    tpu.vector_store %arg7[%c0_179, %c16_180], %560 {strides = array<i32>} : memref<16x32xf32, #tpu.memory_space<vmem>>, vector<2x16xf32>,
    %562 = vector.extract_strided_slice %557 {offsets = [0, 0], sizes = [2, 16], strides = [1, 1]} : vector<2x32xf32> to vector<2x16xf32>
    %c2_181 = arith.constant 2 : index
    %c0_182 = arith.constant 0 : index
    %c0_183 = arith.constant 0 : index
    %563 = vector.load %arg8[%c2_181, %c0_182, %c0_183] : memref<4x2x16xf32, #tpu.memory_space<vmem>>, vector<1x2x16xf32>
    %564 = vector.shape_cast %563 : vector<1x2x16xf32> to vector<2x16xf32>
    %565 = vector.shape_cast %562 : vector<2x16xf32> to vector<1x2x16xf32>
    tpu.vector_store %arg8[%c2_181, %c0_182, %c0_183], %565 {strides = array<i32>} : memref<4x2x16xf32, #tpu.memory_space<vmem>>, vector<1x2x16xf32>,
    %566 = vector.extract_strided_slice %557 {offsets = [0, 16], sizes = [2, 16], strides = [1, 1]} : vector<2x32xf32> to vector<2x16xf32>
    %c3 = arith.constant 3 : index
    %c0_184 = arith.constant 0 : index
    %c0_185 = arith.constant 0 : index
    %567 = vector.load %arg8[%c3, %c0_184, %c0_185] : memref<4x2x16xf32, #tpu.memory_space<vmem>>, vector<1x2x16xf32>
    %568 = vector.shape_cast %567 : vector<1x2x16xf32> to vector<2x16xf32>
    %569 = vector.shape_cast %566 : vector<2x16xf32> to vector<1x2x16xf32>
    tpu.vector_store %arg8[%c3, %c0_184, %c0_185], %569 {strides = array<i32>} : memref<4x2x16xf32, #tpu.memory_space<vmem>>, vector<1x2x16xf32>,
    %570 = vector.extract_strided_slice %555 {offsets = [0, 0], sizes = [2, 16], strides = [1, 1]} : vector<2x32xf32> to vector<2x16xf32>
    %c2_186 = arith.constant 2 : index
    %c0_187 = arith.constant 0 : index
    %c0_188 = arith.constant 0 : index
    %571 = vector.load %arg9[%c2_186, %c0_187, %c0_188] : memref<4x2x16xf32, #tpu.memory_space<vmem>>, vector<1x2x16xf32>
    %572 = vector.shape_cast %571 : vector<1x2x16xf32> to vector<2x16xf32>
    %573 = vector.shape_cast %570 : vector<2x16xf32> to vector<1x2x16xf32>
    tpu.vector_store %arg9[%c2_186, %c0_187, %c0_188], %573 {strides = array<i32>} : memref<4x2x16xf32, #tpu.memory_space<vmem>>, vector<1x2x16xf32>,
    %574 = vector.extract_strided_slice %555 {offsets = [0, 16], sizes = [2, 16], strides = [1, 1]} : vector<2x32xf32> to vector<2x16xf32>
    %c3_189 = arith.constant 3 : index
    %c0_190 = arith.constant 0 : index
    %c0_191 = arith.constant 0 : index
    %575 = vector.load %arg9[%c3_189, %c0_190, %c0_191] : memref<4x2x16xf32, #tpu.memory_space<vmem>>, vector<1x2x16xf32>
    %576 = vector.shape_cast %575 : vector<1x2x16xf32> to vector<2x16xf32>
    %577 = vector.shape_cast %574 : vector<2x16xf32> to vector<1x2x16xf32>
    tpu.vector_store %arg9[%c3_189, %c0_190, %c0_191], %577 {strides = array<i32>} : memref<4x2x16xf32, #tpu.memory_space<vmem>>, vector<1x2x16xf32>,
    return
  }
}

</mosaic_0001>

<llo_original>
// kernel: encoder_forward.1
$region0: #{encoder_forward.1}
  #allocation0 [shape = 'u32[]', space=smem, size = 0x4, offset = 0x4, fixed_abs, tag = 'smem constant byte address 0x4 - core index']
  #allocation1 [shape = 'u32[72,128]{1,0:T(1,128)}', space=vmem, size = 0x9000, scoped, tag = 'internal scratch']
  #allocation2 [shape = 'f32[16,64]{1,0:T(8,128)}', space=vmem, size = 0x2000, scoped, tag = 'scratch operand']
  %s0 = inlined_call_operand.vmem [shape: f32[16,64], index: 0, kind: input, shape index: {}]
  %s1 = inlined_call_operand.vmem [shape: f32[64,128], index: 1, kind: input, shape index: {}]
  %s2 = inlined_call_operand.vmem [shape: f32[32,128], index: 2, kind: input, shape index: {}]
  %s3 = inlined_call_operand.vmem [shape: f32[1,128], index: 3, kind: input, shape index: {}]
  %s4 = inlined_call_operand.vmem [shape: f32[64,128], index: 4, kind: input, shape index: {}]
  %s5 = inlined_call_operand.vmem [shape: f32[32,128], index: 5, kind: input, shape index: {}]
  %s6 = inlined_call_operand.vmem [shape: f32[1,128], index: 6, kind: input, shape index: {}]
  %s7 = inlined_call_operand.vmem [shape: f32[16,32], index: 7, kind: output, shape index: {0}]
  %s8 = inlined_call_operand.hbm [shape: f32[4,2,16], index: 8, kind: output, shape index: {1}]
  %s9 = inlined_call_operand.hbm [shape: f32[4,2,16], index: 9, kind: output, shape index: {2}]
  %10 = xla_tuple %s7, %s8, %s9
  %s11 = sld [smem:[#allocation0]]
  $region54: #{encoder_forward.1} parent=0
    _
  %s13 = ssub.s32 1, %s11
  %s14 = scalar_select 0, %s13, %s11
  $region1: #{encoder_forward.1} parent=0
    #allocation3 [shape = 'u8[4096]{0}', space=vmem, size = 0x1000, scoped, tag = 'output window, operand 1, single buffered']
    #allocation4 [shape = 's32[1]{0}', space=sflag, size = 0x4, scoped, tag = 'scoped memory for encoder_forward.1']
    #allocation5 [shape = 'u8[4096]{0}', space=vmem, size = 0x1000, scoped, tag = 'output window, operand 2, single buffered']
    #allocation6 [shape = 's32[1]{0}', space=sflag, size = 0x4, scoped, tag = 'scoped memory for encoder_forward.1']
    %15 = vsyncpa [#allocation4], 0
    %16 = vsyncpa [#allocation6], 0
    // Predicated region
    $region2: #{encoder_forward.1} parent=1 // pred_check
      _
    $region3: #{encoder_forward.1} parent=1 // pred_check_branch
      %18 = sbr.rel (0) target = $region5
    $region4: #{encoder_forward.1} parent=1 // pred_region
      _
    $region5: #{encoder_forward.1} parent=1 // pred_fallthru
      _
    // Predicated region
    $region6: #{encoder_forward.1} parent=1 // pred_check
      _
    $region7: #{encoder_forward.1} parent=1 // pred_check_branch
      %20 = sbr.rel (0) target = $region9
    $region8: #{encoder_forward.1} parent=1 // pred_region
      _
    $region9: #{encoder_forward.1} parent=1 // pred_fallthru
      _
    // Predicated region
    $region10: #{encoder_forward.1} parent=1 // pred_check
      _
    $region11: #{encoder_forward.1} parent=1 // pred_check_branch
      %22 = sbr.rel (0) target = $region13
    $region12: #{encoder_forward.1} parent=1 // pred_region
      _
    $region13: #{encoder_forward.1} parent=1 // pred_fallthru
      _
    // Predicated region
    $region14: #{encoder_forward.1} parent=1 // pred_check
      _
    $region15: #{encoder_forward.1} parent=1 // pred_check_branch
      %24 = sbr.rel (0) target = $region17
    $region16: #{encoder_forward.1} parent=1 // pred_region
      _
    $region17: #{encoder_forward.1} parent=1 // pred_fallthru
      _
    // Predicated region
    $region18: #{encoder_forward.1} parent=1 // pred_check
      _
    $region19: #{encoder_forward.1} parent=1 // pred_check_branch
      %26 = sbr.rel (0) target = $region21
    $region20: #{encoder_forward.1} parent=1 // pred_region
      _
    $region21: #{encoder_forward.1} parent=1 // pred_fallthru
      _
    // Predicated region
    $region22: #{encoder_forward.1} parent=1 // pred_check
      _
    $region23: #{encoder_forward.1} parent=1 // pred_check_branch
      %28 = sbr.rel (0) target = $region25
    $region24: #{encoder_forward.1} parent=1 // pred_region
      _
    $region25: #{encoder_forward.1} parent=1 // pred_fallthru
      _
    // Predicated region
    $region26: #{encoder_forward.1} parent=1 // pred_check
      _
    $region27: #{encoder_forward.1} parent=1 // pred_check_branch
      %30 = sbr.rel (0) target = $region29
    $region28: #{encoder_forward.1} parent=1 // pred_region
      _
    $region29: #{encoder_forward.1} parent=1 // pred_fallthru
      _
    %v31 = vld [vmem:[%s0] sm:$0xff]
    %v32 = vld [vmem:[%s0 + $0x8] sm:$0xff]
    %v33 = vld [vmem:[%s1] sm:$0xff]
    %v34 = vld [vmem:[%s1 + $0x8] sm:$0xff]
    %v35 = vld [vmem:[%s1 + $0x10] sm:$0xff]
    %v36 = vld [vmem:[%s1 + $0x18] sm:$0xff]
    %v37 = vld [vmem:[%s1 + $0x20] sm:$0xff]
    %v38 = vld [vmem:[%s1 + $0x28] sm:$0xff]
    %v39 = vld [vmem:[%s1 + $0x30] sm:$0xff]
    %v40 = vld [vmem:[%s1 + $0x38] sm:$0xff]
    %v41 = vld [vmem:[%s3] sm:$0x1]
    %v43 = vperm.slane %v41, 0
    %vm45 = vcmask 523264
    %v47 = vsel %vm45, %v31, 0
    %v50 = vsel %vm45, %v32, 0
    %52 = vmatpush.msra.mxu0 0.0
    %53 = vmatpush.msra.mxu0 0.0
    %54 = vmatpush.msra.mxu0 0.0
    %55 = vmatpush.msra.mxu0 0.0
    %56 = vmatpush.msra.mxu0 0.0
    %57 = vmatpush.msra.mxu0 0.0
    %58 = vmatpush.msra.mxu0 0.0
    %59 = vmatpush.msra.mxu0 0.0
    %60 = vmatpush.msra.mxu0 %v40
    %61 = vmatpush.msra.mxu0 %v39
    %62 = vmatpush.msra.mxu0 %v38
    %63 = vmatpush.msra.mxu0 %v37
    %64 = vmatpush.msra.mxu0 %v36
    %65 = vmatpush.msra.mxu0 %v35
    %66 = vmatpush.msra.mxu0 %v34
    %67 = vmatpush.msra.mxu0 %v33
    %68 = vmatmul.f32.gmra.mxu0 %v47
    %v69 = vpop.f32.mrf.mxu0
    %v70 = vadd.f32 %v43, %v69
    %71 = vmatmul.f32.gmra.mxu0 %v50
    %v72 = vpop.f32.mrf.mxu0
    %v73 = vadd.f32 %v43, %v72
    %74 = vdwg.mxu0
    %v75 = vld [vmem:[%s2] sm:$0xff]
    %v76 = vld [vmem:[%s2 + $0x8] sm:$0xff]
    %v77 = vld [vmem:[%s2 + $0x10] sm:$0xff]
    %v78 = vld [vmem:[%s2 + $0x18] sm:$0xff]
    %vm79 = vcmask 261120
    %v81 = vsel %vm79, 0.0, 0
    %83 = vmatpush.msra.mxu0 0.0
    %84 = vmatpush.msra.mxu0 0.0
    %85 = vmatpush.msra.mxu0 0.0
    %86 = vmatpush.msra.mxu0 0.0
    %87 = vmatpush.msra.mxu0 0.0
    %88 = vmatpush.msra.mxu0 0.0
    %89 = vmatpush.msra.mxu0 0.0
    %90 = vmatpush.msra.mxu0 0.0
    %91 = vmatpush.msra.mxu0 0.0
    %92 = vmatpush.msra.mxu0 0.0
    %93 = vmatpush.msra.mxu0 0.0
    %94 = vmatpush.msra.mxu0 0.0
    %95 = vmatpush.msra.mxu0 %v78
    %96 = vmatpush.msra.mxu0 %v77
    %97 = vmatpush.msra.mxu0 %v76
    %98 = vmatpush.msra.mxu0 %v75
    %99 = vmatmul.f32.gmra.mxu0 %v81
    %v100 = vpop.f32.mrf.mxu0
    %v101 = vadd.f32 0.0, %v100
    %102 = vdwg.mxu0
    %v103 = vadd.f32 %v70, %v101
    %v104 = vxor.u32 %v103, 2147483648
    %v105 = vmul.f32 %v104, 1.442695
    %v106 = vpow.pop %v105
    %v107 = vadd.f32 %v106, 1.0
    %v108 = vrcp.pop %v107
    %v109 = vmul.f32 %v107, %v108
    %v110 = vsub.f32 1.0, %v109
    %v111 = vmul.f32 %v108, %v110
    %v112 = vadd.f32 %v108, %v111
    %vm113 = vweird.f32 %v107
    %vm114 = vweird.f32 %v108
    %vm115 = vmor %vm113, %vm114
    %v116 = vsel %vm115, %v108, %v112
    %v117 = vand.u32 2147483647, %v107
    %vm118 = vcmp.eq.f32.partialorder %v117, 8.507059e+37
    %v119 = vand.u32 %v107, 2147483648
    %v120 = vor.u32 1.1754944e-38, %v119
    %v121 = vsel %vm118, %v120, %v116
    %v122 = vmul.f32 1.0, %v121
    %v123 = vtanh.pop %v103
    %v124 = vmul.f32 %v122, 0.0
    %126 = vrot.lane.b32.xlu0 %v123, 64
    %v127 = vpop.permute.xlu0 %126
    %v129 = vmul.f32 %v122, %v127
    %131 = vrot.lane.b32.xlu0 %v129, 32
    %v132 = vpop.permute.xlu0 %131
    %v134 = vadd.f32 %v124, %v132
    %v135 = vtanh.pop %v134
    %137 = vrot.lane.b32.xlu0 %v135, 64
    %v138 = vpop.permute.xlu0 %137
    %v140 = vmul.f32 %v122, %v138
    %142 = vrot.lane.b32.xlu0 %v140, 32
    %v143 = vpop.permute.xlu0 %142
    %vm145 = vcmask 123904
    %146 = vst.msk [vmem:[#allocation2] sm:$0x3] %vm145, %v143
    %vm147 = vcmask 255104
    %148 = vst.msk [vmem:[#allocation2 + $0xe] sm:$0x3] %vm147, %v143
    %149 = vrot.lane.b32.xlu0 %v140, 64
    %v150 = vpop.permute.xlu0 %149
    %vm152 = vcmask 386304
    %153 = vst.msk [vmem:[#allocation2 + $0xe] sm:$0x3] %vm152, %v150
    %vm154 = vcmask 517504
    %155 = vst.msk [vmem:[#allocation2] sm:$0x3] %vm154, %v150
    %v156 = vsel %vm79, %v143, 0
    %158 = vmatpush.msra.mxu0 0.0
    %159 = vmatpush.msra.mxu0 0.0
    %160 = vmatpush.msra.mxu0 0.0
    %161 = vmatpush.msra.mxu0 0.0
    %162 = vmatpush.msra.mxu0 0.0
    %163 = vmatpush.msra.mxu0 0.0
    %164 = vmatpush.msra.mxu0 0.0
    %165 = vmatpush.msra.mxu0 0.0
    %166 = vmatpush.msra.mxu0 0.0
    %167 = vmatpush.msra.mxu0 0.0
    %168 = vmatpush.msra.mxu0 0.0
    %169 = vmatpush.msra.mxu0 0.0
    %170 = vmatpush.msra.mxu0 %v78
    %171 = vmatpush.msra.mxu0 %v77
    %172 = vmatpush.msra.mxu0 %v76
    %173 = vmatpush.msra.mxu0 %v75
    %174 = vmatmul.f32.gmra.mxu0 %v156
    %v175 = vpop.f32.mrf.mxu0
    %v176 = vadd.f32 0.0, %v175
    %177 = vdwg.mxu0
    %v179 = vrot.slane %v176, 6
    %v181 = vadd.f32 %v70, %v179
    %v182 = vxor.u32 %v181, 2147483648
    %v183 = vmul.f32 %v182, 1.442695
    %v184 = vpow.pop %v183
    %v185 = vadd.f32 %v184, 1.0
    %v186 = vrcp.pop %v185
    %v187 = vmul.f32 %v185, %v186
    %v188 = vsub.f32 1.0, %v187
    %v189 = vmul.f32 %v186, %v188
    %v190 = vadd.f32 %v186, %v189
    %vm191 = vweird.f32 %v185
    %vm192 = vweird.f32 %v186
    %vm193 = vmor %vm191, %vm192
    %v194 = vsel %vm193, %v186, %v190
    %v195 = vand.u32 2147483647, %v185
    %vm196 = vcmp.eq.f32.partialorder %v195, 8.507059e+37
    %v197 = vand.u32 %v185, 2147483648
    %v198 = vor.u32 1.1754944e-38, %v197
    %v199 = vsel %vm196, %v198, %v194
    %v200 = vmul.f32 1.0, %v199
    %v201 = vtanh.pop %v181
    %v203 = vrot.slane %v134, 6
    %v205 = vmul.f32 %v200, %v203
    %207 = vrot.lane.b32.xlu0 %v201, 64
    %v208 = vpop.permute.xlu0 %207
    %v210 = vmul.f32 %v200, %v208
    %212 = vrot.lane.b32.xlu0 %v210, 32
    %v213 = vpop.permute.xlu0 %212
    %v215 = vadd.f32 %v205, %v213
    %v216 = vtanh.pop %v215
    %218 = vrot.lane.b32.xlu0 %v216, 64
    %v219 = vpop.permute.xlu0 %218
    %v221 = vmul.f32 %v200, %v219
    %223 = vrot.lane.b32.xlu0 %v221, 32
    %v224 = vpop.permute.xlu0 %223
    %vm226 = vcmask 125954
    %227 = vst.msk [vmem:[#allocation2] sm:$0xc] %vm226, %v224
    %vm228 = vcmask 257154
    %229 = vst.msk [vmem:[#allocation2 + $0xa] sm:$0xc] %vm228, %v224
    %230 = vrot.lane.b32.xlu0 %v221, 64
    %v231 = vpop.permute.xlu0 %230
    %vm233 = vcmask 388354
    %234 = vst.msk [vmem:[#allocation2 + $0xa] sm:$0xc] %vm233, %v231
    %vm235 = vcmask 519554
    %236 = vst.msk [vmem:[#allocation2] sm:$0xc] %vm235, %v231
    %v237 = vrot.slane %v221, 2
    %238 = vrot.lane.b32.xlu0 %v237, 32
    %v239 = vpop.permute.xlu0 %238
    %v240 = vsel %vm79, %v239, 0
    %242 = vmatpush.msra.mxu0 0.0
    %243 = vmatpush.msra.mxu0 0.0
    %244 = vmatpush.msra.mxu0 0.0
    %245 = vmatpush.msra.mxu0 0.0
    %246 = vmatpush.msra.mxu0 0.0
    %247 = vmatpush.msra.mxu0 0.0
    %248 = vmatpush.msra.mxu0 0.0
    %249 = vmatpush.msra.mxu0 0.0
    %250 = vmatpush.msra.mxu0 0.0
    %251 = vmatpush.msra.mxu0 0.0
    %252 = vmatpush.msra.mxu0 0.0
    %253 = vmatpush.msra.mxu0 0.0
    %254 = vmatpush.msra.mxu0 %v78
    %255 = vmatpush.msra.mxu0 %v77
    %256 = vmatpush.msra.mxu0 %v76
    %257 = vmatpush.msra.mxu0 %v75
    %258 = vmatmul.f32.gmra.mxu0 %v240
    %v259 = vpop.f32.mrf.mxu0
    %v260 = vadd.f32 0.0, %v259
    %261 = vdwg.mxu0
    %v263 = vrot.slane %v260, 4
    %v265 = vadd.f32 %v70, %v263
    %v266 = vxor.u32 %v265, 2147483648
    %v267 = vmul.f32 %v266, 1.442695
    %v268 = vpow.pop %v267
    %v269 = vadd.f32 %v268, 1.0
    %v270 = vrcp.pop %v269
    %v271 = vmul.f32 %v269, %v270
    %v272 = vsub.f32 1.0, %v271
    %v273 = vmul.f32 %v270, %v272
    %v274 = vadd.f32 %v270, %v273
    %vm275 = vweird.f32 %v269
    %vm276 = vweird.f32 %v270
    %vm277 = vmor %vm275, %vm276
    %v278 = vsel %vm277, %v270, %v274
    %v279 = vand.u32 2147483647, %v269
    %vm280 = vcmp.eq.f32.partialorder %v279, 8.507059e+37
    %v281 = vand.u32 %v269, 2147483648
    %v282 = vor.u32 1.1754944e-38, %v281
    %v283 = vsel %vm280, %v282, %v278
    %v284 = vmul.f32 1.0, %v283
    %v285 = vtanh.pop %v265
    %v287 = vrot.slane %v215, 6
    %v289 = vmul.f32 %v284, %v287
    %291 = vrot.lane.b32.xlu0 %v285, 64
    %v292 = vpop.permute.xlu0 %291
    %v294 = vmul.f32 %v284, %v292
    %296 = vrot.lane.b32.xlu0 %v294, 32
    %v297 = vpop.permute.xlu0 %296
    %v299 = vadd.f32 %v289, %v297
    %v300 = vtanh.pop %v299
    %302 = vrot.lane.b32.xlu0 %v300, 64
    %v303 = vpop.permute.xlu0 %302
    %v305 = vmul.f32 %v284, %v303
    %307 = vrot.lane.b32.xlu0 %v305, 32
    %v308 = vpop.permute.xlu0 %307
    %vm310 = vcmask 128004
    %311 = vst.msk [vmem:[#allocation2] sm:$0x30] %vm310, %v308
    %vm312 = vcmask 259204
    %313 = vst.msk [vmem:[#allocation2 + $0x6] sm:$0x30] %vm312, %v308
    %314 = vrot.lane.b32.xlu0 %v305, 64
    %v315 = vpop.permute.xlu0 %314
    %vm317 = vcmask 390404
    %318 = vst.msk [vmem:[#allocation2 + $0x6] sm:$0x30] %vm317, %v315
    %vm319 = vcmask 521604
    %320 = vst.msk [vmem:[#allocation2] sm:$0x30] %vm319, %v315
    %v321 = vrot.slane %v305, 4
    %322 = vrot.lane.b32.xlu0 %v321, 32
    %v323 = vpop.permute.xlu0 %322
    %v324 = vsel %vm79, %v323, 0
    %326 = vmatpush.msra.mxu0 0.0
    %327 = vmatpush.msra.mxu0 0.0
    %328 = vmatpush.msra.mxu0 0.0
    %329 = vmatpush.msra.mxu0 0.0
    %330 = vmatpush.msra.mxu0 0.0
    %331 = vmatpush.msra.mxu0 0.0
    %332 = vmatpush.msra.mxu0 0.0
    %333 = vmatpush.msra.mxu0 0.0
    %334 = vmatpush.msra.mxu0 0.0
    %335 = vmatpush.msra.mxu0 0.0
    %336 = vmatpush.msra.mxu0 0.0
    %337 = vmatpush.msra.mxu0 0.0
    %338 = vmatpush.msra.mxu0 %v78
    %339 = vmatpush.msra.mxu0 %v77
    %340 = vmatpush.msra.mxu0 %v76
    %341 = vmatpush.msra.mxu0 %v75
    %342 = vmatmul.f32.gmra.mxu0 %v324
    %v343 = vpop.f32.mrf.mxu0
    %v344 = vadd.f32 0.0, %v343
    %345 = vdwg.mxu0
    %v347 = vrot.slane %v344, 2
    %v349 = vadd.f32 %v70, %v347
    %v350 = vxor.u32 %v349, 2147483648
    %v351 = vmul.f32 %v350, 1.442695
    %v352 = vpow.pop %v351
    %v353 = vadd.f32 %v352, 1.0
    %v354 = vrcp.pop %v353
    %v355 = vmul.f32 %v353, %v354
    %v356 = vsub.f32 1.0, %v355
    %v357 = vmul.f32 %v354, %v356
    %v358 = vadd.f32 %v354, %v357
    %vm359 = vweird.f32 %v353
    %vm360 = vweird.f32 %v354
    %vm361 = vmor %vm359, %vm360
    %v362 = vsel %vm361, %v354, %v358
    %v363 = vand.u32 2147483647, %v353
    %vm364 = vcmp.eq.f32.partialorder %v363, 8.507059e+37
    %v365 = vand.u32 %v353, 2147483648
    %v366 = vor.u32 1.1754944e-38, %v365
    %v367 = vsel %vm364, %v366, %v362
    %v368 = vmul.f32 1.0, %v367
    %v369 = vtanh.pop %v349
    %v371 = vrot.slane %v299, 6
    %v373 = vmul.f32 %v368, %v371
    %375 = vrot.lane.b32.xlu0 %v369, 64
    %v376 = vpop.permute.xlu0 %375
    %v378 = vmul.f32 %v368, %v376
    %380 = vrot.lane.b32.xlu0 %v378, 32
    %v381 = vpop.permute.xlu0 %380
    %v383 = vadd.f32 %v373, %v381
    %v384 = vtanh.pop %v383
    %386 = vrot.lane.b32.xlu0 %v384, 64
    %v387 = vpop.permute.xlu0 %386
    %v389 = vmul.f32 %v368, %v387
    %391 = vrot.lane.b32.xlu0 %v389, 32
    %v392 = vpop.permute.xlu0 %391
    %vm394 = vcmask 130054
    %395 = vst.msk [vmem:[#allocation2] sm:$0xc0] %vm394, %v392
    %vm396 = vcmask 261254
    %397 = vst.msk [vmem:[#allocation2 + $0x2] sm:$0xc0] %vm396, %v392
    %398 = vrot.lane.b32.xlu0 %v389, 64
    %v399 = vpop.permute.xlu0 %398
    %vm401 = vcmask 392454
    %402 = vst.msk [vmem:[#allocation2 + $0x2] sm:$0xc0] %vm401, %v399
    %vm403 = vcmask 523654
    %404 = vst.msk [vmem:[#allocation2] sm:$0xc0] %vm403, %v399
    %v405 = vrot.slane %v389, 6
    %406 = vrot.lane.b32.xlu0 %v405, 32
    %v407 = vpop.permute.xlu0 %406
    %v408 = vsel %vm79, %v407, 0
    %410 = vmatpush.msra.mxu0 0.0
    %411 = vmatpush.msra.mxu0 0.0
    %412 = vmatpush.msra.mxu0 0.0
    %413 = vmatpush.msra.mxu0 0.0
    %414 = vmatpush.msra.mxu0 0.0
    %415 = vmatpush.msra.mxu0 0.0
    %416 = vmatpush.msra.mxu0 0.0
    %417 = vmatpush.msra.mxu0 0.0
    %418 = vmatpush.msra.mxu0 0.0
    %419 = vmatpush.msra.mxu0 0.0
    %420 = vmatpush.msra.mxu0 0.0
    %421 = vmatpush.msra.mxu0 0.0
    %422 = vmatpush.msra.mxu0 %v78
    %423 = vmatpush.msra.mxu0 %v77
    %424 = vmatpush.msra.mxu0 %v76
    %425 = vmatpush.msra.mxu0 %v75
    %426 = vmatmul.f32.gmra.mxu0 %v408
    %v427 = vpop.f32.mrf.mxu0
    %v428 = vadd.f32 0.0, %v427
    %429 = vdwg.mxu0
    %v430 = vadd.f32 %v73, %v428
    %v431 = vxor.u32 %v430, 2147483648
    %v432 = vmul.f32 %v431, 1.442695
    %v433 = vpow.pop %v432
    %v434 = vadd.f32 %v433, 1.0
    %v435 = vrcp.pop %v434
    %v436 = vmul.f32 %v434, %v435
    %v437 = vsub.f32 1.0, %v436
    %v438 = vmul.f32 %v435, %v437
    %v439 = vadd.f32 %v435, %v438
    %vm440 = vweird.f32 %v434
    %vm441 = vweird.f32 %v435
    %vm442 = vmor %vm440, %vm441
    %v443 = vsel %vm442, %v435, %v439
    %v444 = vand.u32 2147483647, %v434
    %vm445 = vcmp.eq.f32.partialorder %v444, 8.507059e+37
    %v446 = vand.u32 %v434, 2147483648
    %v447 = vor.u32 1.1754944e-38, %v446
    %v448 = vsel %vm445, %v447, %v443
    %v449 = vmul.f32 1.0, %v448
    %v450 = vtanh.pop %v430
    %v452 = vrot.slane %v383, 6
    %v454 = vmul.f32 %v449, %v452
    %456 = vrot.lane.b32.xlu0 %v450, 64
    %v457 = vpop.permute.xlu0 %456
    %v459 = vmul.f32 %v449, %v457
    %461 = vrot.lane.b32.xlu0 %v459, 32
    %v462 = vpop.permute.xlu0 %461
    %v464 = vadd.f32 %v454, %v462
    %v465 = vtanh.pop %v464
    %467 = vrot.lane.b32.xlu0 %v465, 64
    %v468 = vpop.permute.xlu0 %467
    %v470 = vmul.f32 %v449, %v468
    %472 = vrot.lane.b32.xlu0 %v470, 32
    %v473 = vpop.permute.xlu0 %472
    %475 = vst.msk [vmem:[#allocation2 + $0x8] sm:$0x3] %vm145, %v473
    %476 = vst.msk [vmem:[#allocation2 + $0x6] sm:$0x3] %vm147, %v473
    %477 = vrot.lane.b32.xlu0 %v470, 64
    %v478 = vpop.permute.xlu0 %477
    %480 = vst.msk [vmem:[#allocation2 + $0x6] sm:$0x3] %vm152, %v478
    %481 = vst.msk [vmem:[#allocation2 + $0x8] sm:$0x3] %vm154, %v478
    %v482 = vsel %vm79, %v473, 0
    %484 = vmatpush.msra.mxu0 0.0
    %485 = vmatpush.msra.mxu0 0.0
    %486 = vmatpush.msra.mxu0 0.0
    %487 = vmatpush.msra.mxu0 0.0
    %488 = vmatpush.msra.mxu0 0.0
    %489 = vmatpush.msra.mxu0 0.0
    %490 = vmatpush.msra.mxu0 0.0
    %491 = vmatpush.msra.mxu0 0.0
    %492 = vmatpush.msra.mxu0 0.0
    %493 = vmatpush.msra.mxu0 0.0
    %494 = vmatpush.msra.mxu0 0.0
    %495 = vmatpush.msra.mxu0 0.0
    %496 = vmatpush.msra.mxu0 %v78
    %497 = vmatpush.msra.mxu0 %v77
    %498 = vmatpush.msra.mxu0 %v76
    %499 = vmatpush.msra.mxu0 %v75
    %500 = vmatmul.f32.gmra.mxu0 %v482
    %v501 = vpop.f32.mrf.mxu0
    %v502 = vadd.f32 0.0, %v501
    %503 = vdwg.mxu0
    %v505 = vrot.slane %v502, 6
    %v507 = vadd.f32 %v73, %v505
    %v508 = vxor.u32 %v507, 2147483648
    %v509 = vmul.f32 %v508, 1.442695
    %v510 = vpow.pop %v509
    %v511 = vadd.f32 %v510, 1.0
    %v512 = vrcp.pop %v511
    %v513 = vmul.f32 %v511, %v512
    %v514 = vsub.f32 1.0, %v513
    %v515 = vmul.f32 %v512, %v514
    %v516 = vadd.f32 %v512, %v515
    %vm517 = vweird.f32 %v511
    %vm518 = vweird.f32 %v512
    %vm519 = vmor %vm517, %vm518
    %v520 = vsel %vm519, %v512, %v516
    %v521 = vand.u32 2147483647, %v511
    %vm522 = vcmp.eq.f32.partialorder %v521, 8.507059e+37
    %v523 = vand.u32 %v511, 2147483648
    %v524 = vor.u32 1.1754944e-38, %v523
    %v525 = vsel %vm522, %v524, %v520
    %v526 = vmul.f32 1.0, %v525
    %v527 = vtanh.pop %v507
    %v529 = vrot.slane %v464, 6
    %v531 = vmul.f32 %v526, %v529
    %533 = vrot.lane.b32.xlu0 %v527, 64
    %v534 = vpop.permute.xlu0 %533
    %v536 = vmul.f32 %v526, %v534
    %538 = vrot.lane.b32.xlu0 %v536, 32
    %v539 = vpop.permute.xlu0 %538
    %v541 = vadd.f32 %v531, %v539
    %v542 = vtanh.pop %v541
    %544 = vrot.lane.b32.xlu0 %v542, 64
    %v545 = vpop.permute.xlu0 %544
    %v547 = vmul.f32 %v526, %v545
    %549 = vrot.lane.b32.xlu0 %v547, 32
    %v550 = vpop.permute.xlu0 %549
    %552 = vst.msk [vmem:[#allocation2 + $0x8] sm:$0xc] %vm226, %v550
    %553 = vst.msk [vmem:[#allocation2 + $0x2] sm:$0xc] %vm228, %v550
    %554 = vrot.lane.b32.xlu0 %v547, 64
    %v555 = vpop.permute.xlu0 %554
    %557 = vst.msk [vmem:[#allocation2 + $0x2] sm:$0xc] %vm233, %v555
    %558 = vst.msk [vmem:[#allocation2 + $0x8] sm:$0xc] %vm235, %v555
    %v559 = vrot.slane %v547, 2
    %560 = vrot.lane.b32.xlu0 %v559, 32
    %v561 = vpop.permute.xlu0 %560
    %v562 = vsel %vm79, %v561, 0
    %564 = vmatpush.msra.mxu0 0.0
    %565 = vmatpush.msra.mxu0 0.0
    %566 = vmatpush.msra.mxu0 0.0
    %567 = vmatpush.msra.mxu0 0.0
    %568 = vmatpush.msra.mxu0 0.0
    %569 = vmatpush.msra.mxu0 0.0
    %570 = vmatpush.msra.mxu0 0.0
    %571 = vmatpush.msra.mxu0 0.0
    %572 = vmatpush.msra.mxu0 0.0
    %573 = vmatpush.msra.mxu0 0.0
    %574 = vmatpush.msra.mxu0 0.0
    %575 = vmatpush.msra.mxu0 0.0
    %576 = vmatpush.msra.mxu0 %v78
    %577 = vmatpush.msra.mxu0 %v77
    %578 = vmatpush.msra.mxu0 %v76
    %579 = vmatpush.msra.mxu0 %v75
    %580 = vmatmul.f32.gmra.mxu0 %v562
    %v581 = vpop.f32.mrf.mxu0
    %v582 = vadd.f32 0.0, %v581
    %583 = vdwg.mxu0
    %v585 = vrot.slane %v582, 4
    %v587 = vadd.f32 %v73, %v585
    %v588 = vxor.u32 %v587, 2147483648
    %v589 = vmul.f32 %v588, 1.442695
    %v590 = vpow.pop %v589
    %v591 = vadd.f32 %v590, 1.0
    %v592 = vrcp.pop %v591
    %v593 = vmul.f32 %v591, %v592
    %v594 = vsub.f32 1.0, %v593
    %v595 = vmul.f32 %v592, %v594
    %v596 = vadd.f32 %v592, %v595
    %vm597 = vweird.f32 %v591
    %vm598 = vweird.f32 %v592
    %vm599 = vmor %vm597, %vm598
    %v600 = vsel %vm599, %v592, %v596
    %v601 = vand.u32 2147483647, %v591
    %vm602 = vcmp.eq.f32.partialorder %v601, 8.507059e+37
    %v603 = vand.u32 %v591, 2147483648
    %v604 = vor.u32 1.1754944e-38, %v603
    %v605 = vsel %vm602, %v604, %v600
    %v606 = vmul.f32 1.0, %v605
    %v607 = vtanh.pop %v587
    %v609 = vrot.slane %v541, 6
    %v611 = vmul.f32 %v606, %v609
    %613 = vrot.lane.b32.xlu0 %v607, 64
    %v614 = vpop.permute.xlu0 %613
    %v616 = vmul.f32 %v606, %v614
    %618 = vrot.lane.b32.xlu0 %v616, 32
    %v619 = vpop.permute.xlu0 %618
    %v621 = vadd.f32 %v611, %v619
    %v622 = vtanh.pop %v621
    %624 = vrot.lane.b32.xlu0 %v622, 64
    %v625 = vpop.permute.xlu0 %624
    %v627 = vmul.f32 %v606, %v625
    %629 = vrot.lane.b32.xlu0 %v627, 32
    %v630 = vpop.permute.xlu0 %629
    %632 = vst.msk [vmem:[#allocation2 + $0x8] sm:$0x30] %vm310, %v630
    %633 = vst.msk [vmem:[#allocation2 - $0x2] sm:$0x30] %vm312, %v630
    %634 = vrot.lane.b32.xlu0 %v627, 64
    %v635 = vpop.permute.xlu0 %634
    %637 = vst.msk [vmem:[#allocation2 - $0x2] sm:$0x30] %vm317, %v635
    %638 = vst.msk [vmem:[#allocation2 + $0x8] sm:$0x30] %vm319, %v635
    %v639 = vrot.slane %v627, 4
    %640 = vrot.lane.b32.xlu0 %v639, 32
    %v641 = vpop.permute.xlu0 %640
    %v642 = vsel %vm79, %v641, 0
    %644 = vmatpush.msra.mxu0 0.0
    %645 = vmatpush.msra.mxu0 0.0
    %646 = vmatpush.msra.mxu0 0.0
    %647 = vmatpush.msra.mxu0 0.0
    %648 = vmatpush.msra.mxu0 0.0
    %649 = vmatpush.msra.mxu0 0.0
    %650 = vmatpush.msra.mxu0 0.0
    %651 = vmatpush.msra.mxu0 0.0
    %652 = vmatpush.msra.mxu0 0.0
    %653 = vmatpush.msra.mxu0 0.0
    %654 = vmatpush.msra.mxu0 0.0
    %655 = vmatpush.msra.mxu0 0.0
    %656 = vmatpush.msra.mxu0 %v78
    %657 = vmatpush.msra.mxu0 %v77
    %658 = vmatpush.msra.mxu0 %v76
    %659 = vmatpush.msra.mxu0 %v75
    %660 = vmatmul.f32.gmra.mxu0 %v642
    %v661 = vpop.f32.mrf.mxu0
    %v662 = vadd.f32 0.0, %v661
    %663 = vdwg.mxu0
    %v665 = vrot.slane %v662, 2
    %v667 = vadd.f32 %v73, %v665
    %v668 = vxor.u32 %v667, 2147483648
    %v669 = vmul.f32 %v668, 1.442695
    %v670 = vpow.pop %v669
    %v671 = vadd.f32 %v670, 1.0
    %v672 = vrcp.pop %v671
    %v673 = vmul.f32 %v671, %v672
    %v674 = vsub.f32 1.0, %v673
    %v675 = vmul.f32 %v672, %v674
    %v676 = vadd.f32 %v672, %v675
    %vm677 = vweird.f32 %v671
    %vm678 = vweird.f32 %v672
    %vm679 = vmor %vm677, %vm678
    %v680 = vsel %vm679, %v672, %v676
    %v681 = vand.u32 2147483647, %v671
    %vm682 = vcmp.eq.f32.partialorder %v681, 8.507059e+37
    %v683 = vand.u32 %v671, 2147483648
    %v684 = vor.u32 1.1754944e-38, %v683
    %v685 = vsel %vm682, %v684, %v680
    %v686 = vmul.f32 1.0, %v685
    %v687 = vtanh.pop %v667
    %v689 = vrot.slane %v621, 6
    %v691 = vmul.f32 %v686, %v689
    %693 = vrot.lane.b32.xlu0 %v687, 64
    %v694 = vpop.permute.xlu0 %693
    %v696 = vmul.f32 %v686, %v694
    %698 = vrot.lane.b32.xlu0 %v696, 32
    %v699 = vpop.permute.xlu0 %698
    %v701 = vadd.f32 %v691, %v699
    %v702 = vtanh.pop %v701
    %704 = vrot.lane.b32.xlu0 %v702, 64
    %v705 = vpop.permute.xlu0 %704
    %v707 = vmul.f32 %v686, %v705
    %709 = vrot.lane.b32.xlu0 %v707, 32
    %v710 = vpop.permute.xlu0 %709
    %712 = vst.msk [vmem:[#allocation2 + $0x8] sm:$0xc0] %vm394, %v710
    %713 = vst.msk [vmem:[#allocation2 - $0x6] sm:$0xc0] %vm396, %v710
    %714 = vrot.lane.b32.xlu0 %v707, 64
    %v715 = vpop.permute.xlu0 %714
    %717 = vst.msk [vmem:[#allocation2 - $0x6] sm:$0xc0] %vm401, %v715
    %718 = vst.msk [vmem:[#allocation2 + $0x8] sm:$0xc0] %vm403, %v715
    %719 = vst.msk [vmem:[#allocation3 - $0x6] sm:$0xc0] %vm394, %v710
    %720 = vrot.lane.b32.xlu0 %v707, 16
    %v721 = vpop.permute.xlu0 %720
    %s723 = scalar_lea.vmem [#allocation3], 2
    %724 = vst.msk [vmem:[%s723 - $0x6] sm:$0xc0] %vm394, %v721
    %726 = vrot.lane.b32.xlu0 %v701, 96
    %v727 = vpop.permute.xlu0 %726
    %729 = vst.msk [vmem:[#allocation5 - $0x6] sm:$0xc0] %vm394, %v727
    %730 = vrot.lane.b32.xlu0 %v701, 80
    %v731 = vpop.permute.xlu0 %730
    %s733 = scalar_lea.vmem [#allocation5], 2
    %734 = vst.msk [vmem:[%s733 - $0x6] sm:$0xc0] %vm394, %v731
    %v735 = vld [vmem:[#allocation2] sm:$0xff]
    %v736 = vld [vmem:[#allocation2 + $0x8] sm:$0xff]
    %v737 = vld [vmem:[%s4] sm:$0xff]
    %v738 = vld [vmem:[%s4 + $0x8] sm:$0xff]
    %v739 = vld [vmem:[%s4 + $0x10] sm:$0xff]
    %v740 = vld [vmem:[%s4 + $0x18] sm:$0xff]
    %v741 = vld [vmem:[%s4 + $0x20] sm:$0xff]
    %v742 = vld [vmem:[%s4 + $0x28] sm:$0xff]
    %v743 = vld [vmem:[%s4 + $0x30] sm:$0xff]
    %v744 = vld [vmem:[%s4 + $0x38] sm:$0xff]
    %v745 = vld [vmem:[%s6] sm:$0x1]
    %v747 = vperm.slane %v745, 0
    %v750 = vsel %vm45, %v735, 0
    %v753 = vsel %vm45, %v736, 0
    %755 = vmatpush.msra.mxu0 0.0
    %756 = vmatpush.msra.mxu0 0.0
    %757 = vmatpush.msra.mxu0 0.0
    %758 = vmatpush.msra.mxu0 0.0
    %759 = vmatpush.msra.mxu0 0.0
    %760 = vmatpush.msra.mxu0 0.0
    %761 = vmatpush.msra.mxu0 0.0
    %762 = vmatpush.msra.mxu0 0.0
    %763 = vmatpush.msra.mxu0 %v744
    %764 = vmatpush.msra.mxu0 %v743
    %765 = vmatpush.msra.mxu0 %v742
    %766 = vmatpush.msra.mxu0 %v741
    %767 = vmatpush.msra.mxu0 %v740
    %768 = vmatpush.msra.mxu0 %v739
    %769 = vmatpush.msra.mxu0 %v738
    %770 = vmatpush.msra.mxu0 %v737
    %771 = vmatmul.f32.gmra.mxu0 %v750
    %v772 = vpop.f32.mrf.mxu0
    %v773 = vadd.f32 %v747, %v772
    %774 = vmatmul.f32.gmra.mxu0 %v753
    %v775 = vpop.f32.mrf.mxu0
    %v776 = vadd.f32 %v747, %v775
    %777 = vdwg.mxu0
    %v778 = vld [vmem:[%s5] sm:$0xff]
    %v779 = vld [vmem:[%s5 + $0x8] sm:$0xff]
    %v780 = vld [vmem:[%s5 + $0x10] sm:$0xff]
    %v781 = vld [vmem:[%s5 + $0x18] sm:$0xff]
    %782 = vmatpush.msra.mxu0 0.0
    %783 = vmatpush.msra.mxu0 0.0
    %784 = vmatpush.msra.mxu0 0.0
    %785 = vmatpush.msra.mxu0 0.0
    %786 = vmatpush.msra.mxu0 0.0
    %787 = vmatpush.msra.mxu0 0.0
    %788 = vmatpush.msra.mxu0 0.0
    %789 = vmatpush.msra.mxu0 0.0
    %790 = vmatpush.msra.mxu0 0.0
    %791 = vmatpush.msra.mxu0 0.0
    %792 = vmatpush.msra.mxu0 0.0
    %793 = vmatpush.msra.mxu0 0.0
    %794 = vmatpush.msra.mxu0 %v781
    %795 = vmatpush.msra.mxu0 %v780
    %796 = vmatpush.msra.mxu0 %v779
    %797 = vmatpush.msra.mxu0 %v778
    %798 = vmatmul.f32.gmra.mxu0 %v81
    %v799 = vpop.f32.mrf.mxu0
    %v800 = vadd.f32 0.0, %v799
    %801 = vdwg.mxu0
    %v802 = vadd.f32 %v773, %v800
    %v803 = vxor.u32 %v802, 2147483648
    %v804 = vmul.f32 %v803, 1.442695
    %v805 = vpow.pop %v804
    %v806 = vadd.f32 %v805, 1.0
    %v807 = vrcp.pop %v806
    %v808 = vmul.f32 %v806, %v807
    %v809 = vsub.f32 1.0, %v808
    %v810 = vmul.f32 %v807, %v809
    %v811 = vadd.f32 %v807, %v810
    %vm812 = vweird.f32 %v806
    %vm813 = vweird.f32 %v807
    %vm814 = vmor %vm812, %vm813
    %v815 = vsel %vm814, %v807, %v811
    %v816 = vand.u32 2147483647, %v806
    %vm817 = vcmp.eq.f32.partialorder %v816, 8.507059e+37
    %v818 = vand.u32 %v806, 2147483648
    %v819 = vor.u32 1.1754944e-38, %v818
    %v820 = vsel %vm817, %v819, %v815
    %v821 = vmul.f32 1.0, %v820
    %v822 = vtanh.pop %v802
    %v823 = vmul.f32 %v821, 0.0
    %825 = vrot.lane.b32.xlu0 %v822, 64
    %v826 = vpop.permute.xlu0 %825
    %v828 = vmul.f32 %v821, %v826
    %830 = vrot.lane.b32.xlu0 %v828, 32
    %v831 = vpop.permute.xlu0 %830
    %v833 = vadd.f32 %v823, %v831
    %v834 = vtanh.pop %v833
    %836 = vrot.lane.b32.xlu0 %v834, 64
    %v837 = vpop.permute.xlu0 %836
    %v839 = vmul.f32 %v821, %v837
    %841 = vrot.lane.b32.xlu0 %v839, 32
    %v842 = vpop.permute.xlu0 %841
    %844 = vst.msk [vmem:[%s7] sm:$0x3] %vm145, %v842
    %845 = vst.msk [vmem:[%s7 + $0xe] sm:$0x3] %vm147, %v842
    %v846 = vsel %vm79, %v842, 0
    %848 = vmatpush.msra.mxu0 0.0
    %849 = vmatpush.msra.mxu0 0.0
    %850 = vmatpush.msra.mxu0 0.0
    %851 = vmatpush.msra.mxu0 0.0
    %852 = vmatpush.msra.mxu0 0.0
    %853 = vmatpush.msra.mxu0 0.0
    %854 = vmatpush.msra.mxu0 0.0
    %855 = vmatpush.msra.mxu0 0.0
    %856 = vmatpush.msra.mxu0 0.0
    %857 = vmatpush.msra.mxu0 0.0
    %858 = vmatpush.msra.mxu0 0.0
    %859 = vmatpush.msra.mxu0 0.0
    %860 = vmatpush.msra.mxu0 %v781
    %861 = vmatpush.msra.mxu0 %v780
    %862 = vmatpush.msra.mxu0 %v779
    %863 = vmatpush.msra.mxu0 %v778
    %864 = vmatmul.f32.gmra.mxu0 %v846
    %v865 = vpop.f32.mrf.mxu0
    %v866 = vadd.f32 0.0, %v865
    %867 = vdwg.mxu0
    %v869 = vrot.slane %v866, 6
    %v871 = vadd.f32 %v773, %v869
    %v872 = vxor.u32 %v871, 2147483648
    %v873 = vmul.f32 %v872, 1.442695
    %v874 = vpow.pop %v873
    %v875 = vadd.f32 %v874, 1.0
    %v876 = vrcp.pop %v875
    %v877 = vmul.f32 %v875, %v876
    %v878 = vsub.f32 1.0, %v877
    %v879 = vmul.f32 %v876, %v878
    %v880 = vadd.f32 %v876, %v879
    %vm881 = vweird.f32 %v875
    %vm882 = vweird.f32 %v876
    %vm883 = vmor %vm881, %vm882
    %v884 = vsel %vm883, %v876, %v880
    %v885 = vand.u32 2147483647, %v875
    %vm886 = vcmp.eq.f32.partialorder %v885, 8.507059e+37
    %v887 = vand.u32 %v875, 2147483648
    %v888 = vor.u32 1.1754944e-38, %v887
    %v889 = vsel %vm886, %v888, %v884
    %v890 = vmul.f32 1.0, %v889
    %v891 = vtanh.pop %v871
    %v893 = vrot.slane %v833, 6
    %v895 = vmul.f32 %v890, %v893
    %897 = vrot.lane.b32.xlu0 %v891, 64
    %v898 = vpop.permute.xlu0 %897
    %v900 = vmul.f32 %v890, %v898
    %902 = vrot.lane.b32.xlu0 %v900, 32
    %v903 = vpop.permute.xlu0 %902
    %v905 = vadd.f32 %v895, %v903
    %v906 = vtanh.pop %v905
    %908 = vrot.lane.b32.xlu0 %v906, 64
    %v909 = vpop.permute.xlu0 %908
    %v911 = vmul.f32 %v890, %v909
    %913 = vrot.lane.b32.xlu0 %v911, 32
    %v914 = vpop.permute.xlu0 %913
    %916 = vst.msk [vmem:[%s7] sm:$0xc] %vm226, %v914
    %917 = vst.msk [vmem:[%s7 + $0xa] sm:$0xc] %vm228, %v914
    %v918 = vrot.slane %v911, 2
    %919 = vrot.lane.b32.xlu0 %v918, 32
    %v920 = vpop.permute.xlu0 %919
    %v921 = vsel %vm79, %v920, 0
    %923 = vmatpush.msra.mxu0 0.0
    %924 = vmatpush.msra.mxu0 0.0
    %925 = vmatpush.msra.mxu0 0.0
    %926 = vmatpush.msra.mxu0 0.0
    %927 = vmatpush.msra.mxu0 0.0
    %928 = vmatpush.msra.mxu0 0.0
    %929 = vmatpush.msra.mxu0 0.0
    %930 = vmatpush.msra.mxu0 0.0
    %931 = vmatpush.msra.mxu0 0.0
    %932 = vmatpush.msra.mxu0 0.0
    %933 = vmatpush.msra.mxu0 0.0
    %934 = vmatpush.msra.mxu0 0.0
    %935 = vmatpush.msra.mxu0 %v781
    %936 = vmatpush.msra.mxu0 %v780
    %937 = vmatpush.msra.mxu0 %v779
    %938 = vmatpush.msra.mxu0 %v778
    %939 = vmatmul.f32.gmra.mxu0 %v921
    %v940 = vpop.f32.mrf.mxu0
    %v941 = vadd.f32 0.0, %v940
    %942 = vdwg.mxu0
    %v944 = vrot.slane %v941, 4
    %v946 = vadd.f32 %v773, %v944
    %v947 = vxor.u32 %v946, 2147483648
    %v948 = vmul.f32 %v947, 1.442695
    %v949 = vpow.pop %v948
    %v950 = vadd.f32 %v949, 1.0
    %v951 = vrcp.pop %v950
    %v952 = vmul.f32 %v950, %v951
    %v953 = vsub.f32 1.0, %v952
    %v954 = vmul.f32 %v951, %v953
    %v955 = vadd.f32 %v951, %v954
    %vm956 = vweird.f32 %v950
    %vm957 = vweird.f32 %v951
    %vm958 = vmor %vm956, %vm957
    %v959 = vsel %vm958, %v951, %v955
    %v960 = vand.u32 2147483647, %v950
    %vm961 = vcmp.eq.f32.partialorder %v960, 8.507059e+37
    %v962 = vand.u32 %v950, 2147483648
    %v963 = vor.u32 1.1754944e-38, %v962
    %v964 = vsel %vm961, %v963, %v959
    %v965 = vmul.f32 1.0, %v964
    %v966 = vtanh.pop %v946
    %v968 = vrot.slane %v905, 6
    %v970 = vmul.f32 %v965, %v968
    %972 = vrot.lane.b32.xlu0 %v966, 64
    %v973 = vpop.permute.xlu0 %972
    %v975 = vmul.f32 %v965, %v973
    %977 = vrot.lane.b32.xlu0 %v975, 32
    %v978 = vpop.permute.xlu0 %977
    %v980 = vadd.f32 %v970, %v978
    %v981 = vtanh.pop %v980
    %983 = vrot.lane.b32.xlu0 %v981, 64
    %v984 = vpop.permute.xlu0 %983
    %v986 = vmul.f32 %v965, %v984
    %988 = vrot.lane.b32.xlu0 %v986, 32
    %v989 = vpop.permute.xlu0 %988
    %991 = vst.msk [vmem:[%s7] sm:$0x30] %vm310, %v989
    %992 = vst.msk [vmem:[%s7 + $0x6] sm:$0x30] %vm312, %v989
    %v993 = vrot.slane %v986, 4
    %994 = vrot.lane.b32.xlu0 %v993, 32
    %v995 = vpop.permute.xlu0 %994
    %v996 = vsel %vm79, %v995, 0
    %998 = vmatpush.msra.mxu0 0.0
    %999 = vmatpush.msra.mxu0 0.0
    %1000 = vmatpush.msra.mxu0 0.0
    %1001 = vmatpush.msra.mxu0 0.0
    %1002 = vmatpush.msra.mxu0 0.0
    %1003 = vmatpush.msra.mxu0 0.0
    %1004 = vmatpush.msra.mxu0 0.0
    %1005 = vmatpush.msra.mxu0 0.0
    %1006 = vmatpush.msra.mxu0 0.0
    %1007 = vmatpush.msra.mxu0 0.0
    %1008 = vmatpush.msra.mxu0 0.0
    %1009 = vmatpush.msra.mxu0 0.0
    %1010 = vmatpush.msra.mxu0 %v781
    %1011 = vmatpush.msra.mxu0 %v780
    %1012 = vmatpush.msra.mxu0 %v779
    %1013 = vmatpush.msra.mxu0 %v778
    %1014 = vmatmul.f32.gmra.mxu0 %v996
    %v1015 = vpop.f32.mrf.mxu0
    %v1016 = vadd.f32 0.0, %v1015
    %1017 = vdwg.mxu0
    %v1019 = vrot.slane %v1016, 2
    %v1021 = vadd.f32 %v773, %v1019
    %v1022 = vxor.u32 %v1021, 2147483648
    %v1023 = vmul.f32 %v1022, 1.442695
    %v1024 = vpow.pop %v1023
    %v1025 = vadd.f32 %v1024, 1.0
    %v1026 = vrcp.pop %v1025
    %v1027 = vmul.f32 %v1025, %v1026
    %v1028 = vsub.f32 1.0, %v1027
    %v1029 = vmul.f32 %v1026, %v1028
    %v1030 = vadd.f32 %v1026, %v1029
    %vm1031 = vweird.f32 %v1025
    %vm1032 = vweird.f32 %v1026
    %vm1033 = vmor %vm1031, %vm1032
    %v1034 = vsel %vm1033, %v1026, %v1030
    %v1035 = vand.u32 2147483647, %v1025
    %vm1036 = vcmp.eq.f32.partialorder %v1035, 8.507059e+37
    %v1037 = vand.u32 %v1025, 2147483648
    %v1038 = vor.u32 1.1754944e-38, %v1037
    %v1039 = vsel %vm1036, %v1038, %v1034
    %v1040 = vmul.f32 1.0, %v1039
    %v1041 = vtanh.pop %v1021
    %v1043 = vrot.slane %v980, 6
    %v1045 = vmul.f32 %v1040, %v1043
    %1047 = vrot.lane.b32.xlu0 %v1041, 64
    %v1048 = vpop.permute.xlu0 %1047
    %v1050 = vmul.f32 %v1040, %v1048
    %1052 = vrot.lane.b32.xlu0 %v1050, 32
    %v1053 = vpop.permute.xlu0 %1052
    %v1055 = vadd.f32 %v1045, %v1053
    %v1056 = vtanh.pop %v1055
    %1058 = vrot.lane.b32.xlu0 %v1056, 64
    %v1059 = vpop.permute.xlu0 %1058
    %v1061 = vmul.f32 %v1040, %v1059
    %1063 = vrot.lane.b32.xlu0 %v1061, 32
    %v1064 = vpop.permute.xlu0 %1063
    %1066 = vst.msk [vmem:[%s7] sm:$0xc0] %vm394, %v1064
    %1067 = vst.msk [vmem:[%s7 + $0x2] sm:$0xc0] %vm396, %v1064
    %v1068 = vrot.slane %v1061, 6
    %1069 = vrot.lane.b32.xlu0 %v1068, 32
    %v1070 = vpop.permute.xlu0 %1069
    %v1071 = vsel %vm79, %v1070, 0
    %1073 = vmatpush.msra.mxu0 0.0
    %1074 = vmatpush.msra.mxu0 0.0
    %1075 = vmatpush.msra.mxu0 0.0
    %1076 = vmatpush.msra.mxu0 0.0
    %1077 = vmatpush.msra.mxu0 0.0
    %1078 = vmatpush.msra.mxu0 0.0
    %1079 = vmatpush.msra.mxu0 0.0
    %1080 = vmatpush.msra.mxu0 0.0
    %1081 = vmatpush.msra.mxu0 0.0
    %1082 = vmatpush.msra.mxu0 0.0
    %1083 = vmatpush.msra.mxu0 0.0
    %1084 = vmatpush.msra.mxu0 0.0
    %1085 = vmatpush.msra.mxu0 %v781
    %1086 = vmatpush.msra.mxu0 %v780
    %1087 = vmatpush.msra.mxu0 %v779
    %1088 = vmatpush.msra.mxu0 %v778
    %1089 = vmatmul.f32.gmra.mxu0 %v1071
    %v1090 = vpop.f32.mrf.mxu0
    %v1091 = vadd.f32 0.0, %v1090
    %1092 = vdwg.mxu0
    %v1093 = vadd.f32 %v776, %v1091
    %v1094 = vxor.u32 %v1093, 2147483648
    %v1095 = vmul.f32 %v1094, 1.442695
    %v1096 = vpow.pop %v1095
    %v1097 = vadd.f32 %v1096, 1.0
    %v1098 = vrcp.pop %v1097
    %v1099 = vmul.f32 %v1097, %v1098
    %v1100 = vsub.f32 1.0, %v1099
    %v1101 = vmul.f32 %v1098, %v1100
    %v1102 = vadd.f32 %v1098, %v1101
    %vm1103 = vweird.f32 %v1097
    %vm1104 = vweird.f32 %v1098
    %vm1105 = vmor %vm1103, %vm1104
    %v1106 = vsel %vm1105, %v1098, %v1102
    %v1107 = vand.u32 2147483647, %v1097
    %vm1108 = vcmp.eq.f32.partialorder %v1107, 8.507059e+37
    %v1109 = vand.u32 %v1097, 2147483648
    %v1110 = vor.u32 1.1754944e-38, %v1109
    %v1111 = vsel %vm1108, %v1110, %v1106
    %v1112 = vmul.f32 1.0, %v1111
    %v1113 = vtanh.pop %v1093
    %v1115 = vrot.slane %v1055, 6
    %v1117 = vmul.f32 %v1112, %v1115
    %1119 = vrot.lane.b32.xlu0 %v1113, 64
    %v1120 = vpop.permute.xlu0 %1119
    %v1122 = vmul.f32 %v1112, %v1120
    %1124 = vrot.lane.b32.xlu0 %v1122, 32
    %v1125 = vpop.permute.xlu0 %1124
    %v1127 = vadd.f32 %v1117, %v1125
    %v1128 = vtanh.pop %v1127
    %1130 = vrot.lane.b32.xlu0 %v1128, 64
    %v1131 = vpop.permute.xlu0 %1130
    %v1133 = vmul.f32 %v1112, %v1131
    %1135 = vrot.lane.b32.xlu0 %v1133, 32
    %v1136 = vpop.permute.xlu0 %1135
    %1138 = vst.msk [vmem:[%s7 + $0x8] sm:$0x3] %vm145, %v1136
    %1139 = vst.msk [vmem:[%s7 + $0x6] sm:$0x3] %vm147, %v1136
    %v1140 = vsel %vm79, %v1136, 0
    %1142 = vmatpush.msra.mxu0 0.0
    %1143 = vmatpush.msra.mxu0 0.0
    %1144 = vmatpush.msra.mxu0 0.0
    %1145 = vmatpush.msra.mxu0 0.0
    %1146 = vmatpush.msra.mxu0 0.0
    %1147 = vmatpush.msra.mxu0 0.0
    %1148 = vmatpush.msra.mxu0 0.0
    %1149 = vmatpush.msra.mxu0 0.0
    %1150 = vmatpush.msra.mxu0 0.0
    %1151 = vmatpush.msra.mxu0 0.0
    %1152 = vmatpush.msra.mxu0 0.0
    %1153 = vmatpush.msra.mxu0 0.0
    %1154 = vmatpush.msra.mxu0 %v781
    %1155 = vmatpush.msra.mxu0 %v780
    %1156 = vmatpush.msra.mxu0 %v779
    %1157 = vmatpush.msra.mxu0 %v778
    %1158 = vmatmul.f32.gmra.mxu0 %v1140
    %v1159 = vpop.f32.mrf.mxu0
    %v1160 = vadd.f32 0.0, %v1159
    %1161 = vdwg.mxu0
    %v1163 = vrot.slane %v1160, 6
    %v1165 = vadd.f32 %v776, %v1163
    %v1166 = vxor.u32 %v1165, 2147483648
    %v1167 = vmul.f32 %v1166, 1.442695
    %v1168 = vpow.pop %v1167
    %v1169 = vadd.f32 %v1168, 1.0
    %v1170 = vrcp.pop %v1169
    %v1171 = vmul.f32 %v1169, %v1170
    %v1172 = vsub.f32 1.0, %v1171
    %v1173 = vmul.f32 %v1170, %v1172
    %v1174 = vadd.f32 %v1170, %v1173
    %vm1175 = vweird.f32 %v1169
    %vm1176 = vweird.f32 %v1170
    %vm1177 = vmor %vm1175, %vm1176
    %v1178 = vsel %vm1177, %v1170, %v1174
    %v1179 = vand.u32 2147483647, %v1169
    %vm1180 = vcmp.eq.f32.partialorder %v1179, 8.507059e+37
    %v1181 = vand.u32 %v1169, 2147483648
    %v1182 = vor.u32 1.1754944e-38, %v1181
    %v1183 = vsel %vm1180, %v1182, %v1178
    %v1184 = vmul.f32 1.0, %v1183
    %v1185 = vtanh.pop %v1165
    %v1187 = vrot.slane %v1127, 6
    %v1189 = vmul.f32 %v1184, %v1187
    %1191 = vrot.lane.b32.xlu0 %v1185, 64
    %v1192 = vpop.permute.xlu0 %1191
    %v1194 = vmul.f32 %v1184, %v1192
    %1196 = vrot.lane.b32.xlu0 %v1194, 32
    %v1197 = vpop.permute.xlu0 %1196
    %v1199 = vadd.f32 %v1189, %v1197
    %v1200 = vtanh.pop %v1199
    %1202 = vrot.lane.b32.xlu0 %v1200, 64
    %v1203 = vpop.permute.xlu0 %1202
    %v1205 = vmul.f32 %v1184, %v1203
    %1207 = vrot.lane.b32.xlu0 %v1205, 32
    %v1208 = vpop.permute.xlu0 %1207
    %1210 = vst.msk [vmem:[%s7 + $0x8] sm:$0xc] %vm226, %v1208
    %1211 = vst.msk [vmem:[%s7 + $0x2] sm:$0xc] %vm228, %v1208
    %v1212 = vrot.slane %v1205, 2
    %1213 = vrot.lane.b32.xlu0 %v1212, 32
    %v1214 = vpop.permute.xlu0 %1213
    %v1215 = vsel %vm79, %v1214, 0
    %1217 = vmatpush.msra.mxu0 0.0
    %1218 = vmatpush.msra.mxu0 0.0
    %1219 = vmatpush.msra.mxu0 0.0
    %1220 = vmatpush.msra.mxu0 0.0
    %1221 = vmatpush.msra.mxu0 0.0
    %1222 = vmatpush.msra.mxu0 0.0
    %1223 = vmatpush.msra.mxu0 0.0
    %1224 = vmatpush.msra.mxu0 0.0
    %1225 = vmatpush.msra.mxu0 0.0
    %1226 = vmatpush.msra.mxu0 0.0
    %1227 = vmatpush.msra.mxu0 0.0
    %1228 = vmatpush.msra.mxu0 0.0
    %1229 = vmatpush.msra.mxu0 %v781
    %1230 = vmatpush.msra.mxu0 %v780
    %1231 = vmatpush.msra.mxu0 %v779
    %1232 = vmatpush.msra.mxu0 %v778
    %1233 = vmatmul.f32.gmra.mxu0 %v1215
    %v1234 = vpop.f32.mrf.mxu0
    %v1235 = vadd.f32 0.0, %v1234
    %1236 = vdwg.mxu0
    %v1238 = vrot.slane %v1235, 4
    %v1240 = vadd.f32 %v776, %v1238
    %v1241 = vxor.u32 %v1240, 2147483648
    %v1242 = vmul.f32 %v1241, 1.442695
    %v1243 = vpow.pop %v1242
    %v1244 = vadd.f32 %v1243, 1.0
    %v1245 = vrcp.pop %v1244
    %v1246 = vmul.f32 %v1244, %v1245
    %v1247 = vsub.f32 1.0, %v1246
    %v1248 = vmul.f32 %v1245, %v1247
    %v1249 = vadd.f32 %v1245, %v1248
    %vm1250 = vweird.f32 %v1244
    %vm1251 = vweird.f32 %v1245
    %vm1252 = vmor %vm1250, %vm1251
    %v1253 = vsel %vm1252, %v1245, %v1249
    %v1254 = vand.u32 2147483647, %v1244
    %vm1255 = vcmp.eq.f32.partialorder %v1254, 8.507059e+37
    %v1256 = vand.u32 %v1244, 2147483648
    %v1257 = vor.u32 1.1754944e-38, %v1256
    %v1258 = vsel %vm1255, %v1257, %v1253
    %v1259 = vmul.f32 1.0, %v1258
    %v1260 = vtanh.pop %v1240
    %v1262 = vrot.slane %v1199, 6
    %v1264 = vmul.f32 %v1259, %v1262
    %1266 = vrot.lane.b32.xlu0 %v1260, 64
    %v1267 = vpop.permute.xlu0 %1266
    %v1269 = vmul.f32 %v1259, %v1267
    %1271 = vrot.lane.b32.xlu0 %v1269, 32
    %v1272 = vpop.permute.xlu0 %1271
    %v1274 = vadd.f32 %v1264, %v1272
    %v1275 = vtanh.pop %v1274
    %1277 = vrot.lane.b32.xlu0 %v1275, 64
    %v1278 = vpop.permute.xlu0 %1277
    %v1280 = vmul.f32 %v1259, %v1278
    %1282 = vrot.lane.b32.xlu0 %v1280, 32
    %v1283 = vpop.permute.xlu0 %1282
    %1285 = vst.msk [vmem:[%s7 + $0x8] sm:$0x30] %vm310, %v1283
    %1286 = vst.msk [vmem:[%s7 - $0x2] sm:$0x30] %vm312, %v1283
    %v1287 = vrot.slane %v1280, 4
    %1288 = vrot.lane.b32.xlu0 %v1287, 32
    %v1289 = vpop.permute.xlu0 %1288
    %v1290 = vsel %vm79, %v1289, 0
    %1292 = vmatpush.msra.mxu0 0.0
    %1293 = vmatpush.msra.mxu0 0.0
    %1294 = vmatpush.msra.mxu0 0.0
    %1295 = vmatpush.msra.mxu0 0.0
    %1296 = vmatpush.msra.mxu0 0.0
    %1297 = vmatpush.msra.mxu0 0.0
    %1298 = vmatpush.msra.mxu0 0.0
    %1299 = vmatpush.msra.mxu0 0.0
    %1300 = vmatpush.msra.mxu0 0.0
    %1301 = vmatpush.msra.mxu0 0.0
    %1302 = vmatpush.msra.mxu0 0.0
    %1303 = vmatpush.msra.mxu0 0.0
    %1304 = vmatpush.msra.mxu0 %v781
    %1305 = vmatpush.msra.mxu0 %v780
    %1306 = vmatpush.msra.mxu0 %v779
    %1307 = vmatpush.msra.mxu0 %v778
    %1308 = vmatmul.f32.gmra.mxu0 %v1290
    %v1309 = vpop.f32.mrf.mxu0
    %v1310 = vadd.f32 0.0, %v1309
    %1311 = vdwg.mxu0
    %v1313 = vrot.slane %v1310, 2
    %v1315 = vadd.f32 %v776, %v1313
    %v1316 = vxor.u32 %v1315, 2147483648
    %v1317 = vmul.f32 %v1316, 1.442695
    %v1318 = vpow.pop %v1317
    %v1319 = vadd.f32 %v1318, 1.0
    %v1320 = vrcp.pop %v1319
    %v1321 = vmul.f32 %v1319, %v1320
    %v1322 = vsub.f32 1.0, %v1321
    %v1323 = vmul.f32 %v1320, %v1322
    %v1324 = vadd.f32 %v1320, %v1323
    %vm1325 = vweird.f32 %v1319
    %vm1326 = vweird.f32 %v1320
    %vm1327 = vmor %vm1325, %vm1326
    %v1328 = vsel %vm1327, %v1320, %v1324
    %v1329 = vand.u32 2147483647, %v1319
    %vm1330 = vcmp.eq.f32.partialorder %v1329, 8.507059e+37
    %v1331 = vand.u32 %v1319, 2147483648
    %v1332 = vor.u32 1.1754944e-38, %v1331
    %v1333 = vsel %vm1330, %v1332, %v1328
    %v1334 = vmul.f32 1.0, %v1333
    %v1335 = vtanh.pop %v1315
    %v1337 = vrot.slane %v1274, 6
    %v1339 = vmul.f32 %v1334, %v1337
    %1341 = vrot.lane.b32.xlu0 %v1335, 64
    %v1342 = vpop.permute.xlu0 %1341
    %v1344 = vmul.f32 %v1334, %v1342
    %1346 = vrot.lane.b32.xlu0 %v1344, 32
    %v1347 = vpop.permute.xlu0 %1346
    %v1349 = vadd.f32 %v1339, %v1347
    %v1350 = vtanh.pop %v1349
    %1352 = vrot.lane.b32.xlu0 %v1350, 64
    %v1353 = vpop.permute.xlu0 %1352
    %v1355 = vmul.f32 %v1334, %v1353
    %1357 = vrot.lane.b32.xlu0 %v1355, 32
    %v1358 = vpop.permute.xlu0 %1357
    %1360 = vst.msk [vmem:[%s7 + $0x8] sm:$0xc0] %vm394, %v1358
    %1361 = vst.msk [vmem:[%s7 - $0x6] sm:$0xc0] %vm396, %v1358
    %s1362 = scalar_lea.vmem [#allocation3], 4
    %1363 = vst.msk [vmem:[%s1362 - $0x6] sm:$0xc0] %vm394, %v1358
    %1364 = vrot.lane.b32.xlu0 %v1355, 16
    %v1365 = vpop.permute.xlu0 %1364
    %s1367 = scalar_lea.vmem [#allocation3], 6
    %1368 = vst.msk [vmem:[%s1367 - $0x6] sm:$0xc0] %vm394, %v1365
    %1370 = vrot.lane.b32.xlu0 %v1349, 96
    %v1371 = vpop.permute.xlu0 %1370
    %s1373 = scalar_lea.vmem [#allocation5], 4
    %1374 = vst.msk [vmem:[%s1373 - $0x6] sm:$0xc0] %vm394, %v1371
    %1375 = vrot.lane.b32.xlu0 %v1349, 80
    %v1376 = vpop.permute.xlu0 %1375
    %s1378 = scalar_lea.vmem [#allocation5], 6
    %1379 = vst.msk [vmem:[%s1378 - $0x6] sm:$0xc0] %vm394, %v1376
    // Predicated region
    $region30: #{encoder_forward.1} parent=1 // pred_check
      _
    $region31: #{encoder_forward.1} parent=1 // pred_check_branch
      %1381 = sbr.rel (0) target = $region33
    $region32: #{encoder_forward.1} parent=1 // pred_region
      _
    $region33: #{encoder_forward.1} parent=1 // pred_fallthru
      _
    // Predicated region
    $region34: #{encoder_forward.1} parent=1 // pred_check
      _
    $region35: #{encoder_forward.1} parent=1 // pred_check_branch
      %1383 = sbr.rel (0) target = $region37
    $region36: #{encoder_forward.1} parent=1 // pred_region
      %1385 = vsyncadd [#allocation4], 0
      %s1386 = sshll.u32 [#allocation3], 4
      %s1387 = int_to_ptr.vmem [resolvable:$true] %s1386
      %s1388 = sshll.u32 %s8, 4
      %s1389 = int_to_ptr.hbm [resolvable:$true] %s1388
      %1394 = dma.vmem_to_hbm [thread:$0]  %s1387, 128, %s1389, [#allocation4], 32, 32, 2
    $region37: #{encoder_forward.1} parent=1 // pred_fallthru
      _
    // Predicated region
    $region38: #{encoder_forward.1} parent=1 // pred_check
      _
    $region39: #{encoder_forward.1} parent=1 // pred_check_branch
      %1396 = sbr.rel (0) target = $region41
    $region40: #{encoder_forward.1} parent=1 // pred_region
      %1398 = vsyncadd [#allocation6], 0
      %s1399 = sshll.u32 [#allocation5], 4
      %s1400 = int_to_ptr.vmem [resolvable:$true] %s1399
      %s1401 = sshll.u32 %s9, 4
      %s1402 = int_to_ptr.hbm [resolvable:$true] %s1401
      %1407 = dma.vmem_to_hbm [thread:$0]  %s1400, 128, %s1402, [#allocation6], 32, 32, 2
    $region41: #{encoder_forward.1} parent=1 // pred_fallthru
      _
    // Predicated region
    $region42: #{encoder_forward.1} parent=1 // pred_check
      _
    $region43: #{encoder_forward.1} parent=1 // pred_check_branch
      %1409 = sbr.rel (0) target = $region45
    $region44: #{encoder_forward.1} parent=1 // pred_region
      _
    $region45: #{encoder_forward.1} parent=1 // pred_fallthru
      _
    // Predicated region
    $region46: #{encoder_forward.1} parent=1 // pred_check
      _
    $region47: #{encoder_forward.1} parent=1 // pred_check_branch
      %1411 = sbr.rel (0) target = $region49
    $region48: #{encoder_forward.1} parent=1 // pred_region
      %1413 = dma.done [#allocation4], 128
    $region49: #{encoder_forward.1} parent=1 // pred_fallthru
      _
    // Predicated region
    $region50: #{encoder_forward.1} parent=1 // pred_check
      _
    $region51: #{encoder_forward.1} parent=1 // pred_check_branch
      %1415 = sbr.rel (0) target = $region53
    $region52: #{encoder_forward.1} parent=1 // pred_region
      %1417 = dma.done [#allocation6], 128
    $region53: #{encoder_forward.1} parent=1 // pred_fallthru
      _
    %1418 = vsyncpa [#allocation4], 1
    %1419 = vsyncpa [#allocation6], 1

</llo_original>
